<compile_context>
chip_gen: v7x
topology: tpu7x:2x2x1
jax: 0.10.0
libtpu: 0.0.40
codegen_flags: <defaults>
</compile_context>

<pallas_src>
import jax
import jax.numpy as jnp
from jax.experimental import pallas as pl
from jax.experimental.pallas import tpu as pltpu

LANE = 128                        # TPU lane width; all GEMM N dims padded to it
VMEM_LIMIT = 48 * 1024 * 1024     # explicit scoped-VMEM cap, < v7x 64 MiB
C1, C2, FC2_OUT = 6, 16, 84


# ----------------------------- small helpers -------------------------------

def _round_up(x, m):
    return -(-x // m) * m


def _pad_last(x, target):
    pad = target - x.shape[-1]
    if pad == 0:
        return x
    return jnp.pad(x, [(0, 0)] * (x.ndim - 1) + [(0, pad)])


def _pad_to(x, shape):
    return jnp.pad(x, [(0, t - s) for s, t in zip(x.shape, shape)])


# ----------------------------- Pallas kernels -------------------------------

def _conv_relu_pool_kernel(p_ref, w_ref, b_ref, o_ref):
    """Fused conv-as-GEMM + bias + ReLU + 2x2/2 max-pool for one image.

    p_ref: (1, 4, Mo, Kp) bf16  im2col patches, rows grouped by pool tap
    w_ref: (Kp, 128)      bf16  conv weights (K padded, out-channels padded)
    b_ref: (1, 128)       f32   bias (padded)
    o_ref: (1, Mo, 128)   bf16  pooled activation, Mo = (Ho//2)*(Wo//2)
    """
    w = w_ref[...]

    # max over the 2x2 pool window of the raw matmul outputs; bias + ReLU are
    # monotone, so applying them once after the max is exact.
    pooled = jnp.dot(p_ref[0, 0], w, preferred_element_type=jnp.float32)
    for t in range(1, 4):
        pooled = jnp.maximum(
            pooled, jnp.dot(p_ref[0, t], w, preferred_element_type=jnp.float32))
    y = jnp.maximum(pooled + b_ref[...], 0.0)
    o_ref[0, :, :] = y.astype(o_ref.dtype)


def conv_relu_pool(patches, w, b):
    """patches: (B, 4, Mo, Kp) bf16 -> (B, Mo, 128) bf16 pooled activation."""
    B, T, Mo, Kp = patches.shape
    N = w.shape[1]
    return pl.pallas_call(
        _conv_relu_pool_kernel,
        out_shape=jax.ShapeDtypeStruct((B, Mo, N), jnp.bfloat16),
        grid=(B,),
        in_specs=[
            pl.BlockSpec((1, T, Mo, Kp), lambda i: (i, 0, 0, 0)),
            pl.BlockSpec((Kp, N), lambda i: (0, 0)),
            pl.BlockSpec((1, N), lambda i: (0, 0)),
        ],
        out_specs=pl.BlockSpec((1, Mo, N), lambda i: (i, 0, 0)),
        compiler_params=pltpu.CompilerParams(
            dimension_semantics=("parallel",),
            vmem_limit_bytes=VMEM_LIMIT),
    )(patches, w, b)


def _fc_fused_kernel(x_ref, w1_ref, b1_ref, w2_ref, b2_ref, o_ref):
    """Fused fc1 + ReLU + fc2 on one M tile (bf16 MXU inputs, f32 accum)."""
    h = jnp.dot(x_ref[...], w1_ref[...], preferred_element_type=jnp.float32)
    h = jnp.maximum(h + b1_ref[...], 0.0)
    y = jnp.dot(h.astype(jnp.bfloat16), w2_ref[...],
                preferred_element_type=jnp.float32)
    o_ref[...] = (y + b2_ref[...]).astype(o_ref.dtype)


def fc_fused(x, w1, b1, w2, b2):
    """x: (B, K) -> (B, 128) f32, M tiled over a parallel grid."""
    B, K = x.shape
    Kp, N1 = w1.shape
    N2 = w2.shape[1]
    tm = 128 if B >= 128 else _round_up(B, 8)
    Bp = _round_up(B, tm)
    xp = jnp.zeros((Bp, Kp), jnp.bfloat16).at[:B, :K].set(x.astype(jnp.bfloat16))
    out = pl.pallas_call(
        _fc_fused_kernel,
        out_shape=jax.ShapeDtypeStruct((Bp, N2), jnp.float32),
        grid=(Bp // tm,),
        in_specs=[
            pl.BlockSpec((tm, Kp), lambda i: (i, 0)),
            pl.BlockSpec((Kp, N1), lambda i: (0, 0)),
            pl.BlockSpec((1, N1), lambda i: (0, 0)),
            pl.BlockSpec((N1, N2), lambda i: (0, 0)),
            pl.BlockSpec((1, N2), lambda i: (0, 0)),
        ],
        out_specs=pl.BlockSpec((tm, N2), lambda i: (i, 0)),
        compiler_params=pltpu.CompilerParams(
            dimension_semantics=("parallel",),
            vmem_limit_bytes=VMEM_LIMIT),
    )(xp, w1, b1, w2, b2)
    return out[:B]


# --------------------- im2col with pool-tap grouping ------------------------

def _pool_grouped_patches(x_nhwc, k):
    """Patches for a VALID kxk conv, rows grouped by 2x2/2 pool tap.

    Returns (B, 4, Mo, k*k*C) with tap t = 2*dh + dw selecting conv output
    position (2*ho2+dh, 2*wo2+dw), row m = ho2*(Wo//2)+wo2, and K ordered
    (kh, kw, c) to match the weight layout built in prepare_params.
    """
    B, H, W, C = x_nhwc.shape
    Ho, Wo = H - k + 1, W - k + 1
    assert Ho % 2 == 0 and Wo % 2 == 0
    cols = [x_nhwc[:, kh:kh + Ho, kw:kw + Wo, :]
            for kh in range(k) for kw in range(k)]
    p = jnp.stack(cols, axis=3)                            # (B, Ho, Wo, k*k, C)
    p = p.reshape(B, Ho // 2, 2, Wo // 2, 2, k * k * C)
    p = p.transpose(0, 2, 4, 1, 3, 5)                      # (B, 2, 2, Ho/2, Wo/2, K)
    return p.reshape(B, 4, (Ho // 2) * (Wo // 2), k * k * C), Ho // 2, Wo // 2


# ----------------------------- parameters -----------------------------------

def init_params(key):
    """Raw parameters with PyTorch shapes and default fan_in-uniform init."""
    def uniform(k, shape, fan_in):
        bound = 1.0 / float(fan_in) ** 0.5
        return jax.random.uniform(k, shape, jnp.float32, -bound, bound)

    ks = jax.random.split(key, 8)
    return {
        "conv1_w": uniform(ks[0], (6, 3, 5, 5), 3 * 5 * 5),
        "conv1_b": uniform(ks[1], (6,), 3 * 5 * 5),
        "conv2_w": uniform(ks[2], (16, 6, 5, 5), 6 * 5 * 5),
        "conv2_b": uniform(ks[3], (16,), 6 * 5 * 5),
        "fc1_w": uniform(ks[4], (120, 400), 400),
        "fc1_b": uniform(ks[5], (120,), 400),
        "fc2_w": uniform(ks[6], (84, 120), 120),
        "fc2_b": uniform(ks[7], (84,), 120),
    }


def prepare_params(raw):
    """Pad / transpose / cast PyTorch-layout params into kernel layouts."""
    def conv_w(w, kp):                       # (O,C,k,k) -> (k*k*C, 128), (kh,kw,c)
        o, c, k, _ = w.shape
        w2 = jnp.transpose(w, (2, 3, 1, 0)).reshape(k * k * c, o)
        return _pad_to(w2, (kp, LANE)).astype(jnp.bfloat16)

    def fc_w(w, kp):                         # torch (out,in) -> (in_pad, 128)
        return _pad_to(w.T, (kp, LANE)).astype(jnp.bfloat16)

    def bias(b):
        return _pad_last(b.reshape(1, -1), LANE).astype(jnp.float32)

    return {
        "conv1_w": conv_w(raw["conv1_w"], 128), "conv1_b": bias(raw["conv1_b"]),
        "conv2_w": conv_w(raw["conv2_w"], 256), "conv2_b": bias(raw["conv2_b"]),
        "fc1_w": fc_w(raw["fc1_w"], 512), "fc1_b": bias(raw["fc1_b"]),
        "fc2_w": fc_w(raw["fc2_w"], 128), "fc2_b": bias(raw["fc2_b"]),
    }


# ----------------------------- forward pass ---------------------------------

def net_forward(params, x):
    """x: (B, 3, 32, 32) f32 -> (B, 84) f32 (matches torch Net.forward)."""
    B = x.shape[0]
    x = jnp.transpose(x, (0, 2, 3, 1))                       # NHWC, once

    p1, ph1, pw1 = _pool_grouped_patches(x, 5)               # (B, 4, 196, 75)
    p1 = _pad_last(p1.astype(jnp.bfloat16), 128)
    a1 = conv_relu_pool(p1, params["conv1_w"], params["conv1_b"])  # (B,196,128)

    act1 = a1[:, :, :C1].reshape(B, ph1, pw1, C1)            # (B,14,14,6) NHWC
    p2, ph2, pw2 = _pool_grouped_patches(act1, 5)            # (B, 4, 25, 150)
    p2 = _pad_last(p2.astype(jnp.bfloat16), 256)
    a2 = conv_relu_pool(p2, params["conv2_w"], params["conv2_b"])  # (B,25,128)

    # flatten in torch NCHW order: x.view(-1, 16*5*5)
    feat = jnp.transpose(a2[:, :, :C2], (0, 2, 1)).reshape(B, C2 * ph2 * pw2)
    out = fc_fused(feat, params["fc1_w"], params["fc1_b"],
                   params["fc2_w"], params["fc2_b"])
    return out[:, :FC2_OUT]


# ----------------------------- f32 reference --------------------------------

def reference_forward(raw, x):
    """Pure-JAX f32 reference implementing the exact PyTorch forward."""
    def conv(y, w, b):
        y = jax.lax.conv_general_dilated(
            y, w, window_strides=(1, 1), padding="VALID",
            dimension_numbers=("NCHW", "OIHW", "NCHW"))
        return y + b.reshape(1, -1, 1, 1)

    def pool(y):
        return jax.lax.reduce_window(y, -jnp.inf, jax.lax.max,
                                     (1, 1, 2, 2), (1, 1, 2, 2), "VALID")

    y = pool(jax.nn.relu(conv(x, raw["conv1_w"], raw["conv1_b"])))
    y = pool(jax.nn.relu(conv(y, raw["conv2_w"], raw["conv2_b"])))
    y = y.reshape(y.shape[0], -1)
    y = jax.nn.relu(y @ raw["fc1_w"].T + raw["fc1_b"])
    return y @ raw["fc2_w"].T + raw["fc2_b"]


if __name__ == "__main__":
    key = jax.random.PRNGKey(0)
    pkey, xkey = jax.random.split(key)
    raw = init_params(pkey)
    params = prepare_params(raw)
    # Net's conv/pool stack requires a 32x32 spatial input to reach 16*5*5.
    x = jax.random.normal(xkey, (2, 3, 32, 32), jnp.float32)

    out = jax.jit(net_forward)(params, x)
    out = jax.block_until_ready(out)
    assert out.shape == (2, FC2_OUT) and out.dtype == jnp.float32

    ref = reference_forward(raw, x)
    err = float(jnp.max(jnp.abs(out - ref)))
    assert err < 1e-1, f"kernel output deviates from f32 reference: {err}"
    print("KERNEL_OK")
</pallas_src>

<mosaic_0001>
module attributes {stable_mosaic.version = 11 : i64} {
  func.func @_conv_relu_pool_kernel(%arg0: i32, %arg1: memref<1x4x196x128xbf16, #tpu.memory_space<vmem>>, %arg2: memref<128x128xbf16, #tpu.memory_space<vmem>>, %arg3: memref<1x128xf32, #tpu.memory_space<vmem>>, %arg4: memref<1x196x128xbf16, #tpu.memory_space<vmem>>) attributes {dimension_semantics = [#tpu.dimension_semantics<parallel>], iteration_bounds = array<i64: 2>, scalar_prefetch = 0 : i64, scratch_operands = 0 : i64, tpu.core_type = #tpu.core_type<tc>, window_params = [{transform_indices = @transform_0, window_bounds = array<i64: 1, 4, 196, 128>}, {pipeline_mode = #tpu.pipeline_mode<synchronous>, transform_indices = @transform_1, window_bounds = array<i64: 128, 128>}, {pipeline_mode = #tpu.pipeline_mode<synchronous>, transform_indices = @transform_2, window_bounds = array<i64: 1, 128>}, {transform_indices = @transform_3, window_bounds = array<i64: 1, 196, 128>}]} {
    %c0 = arith.constant 0 : index
    %c0_0 = arith.constant 0 : index
    %0 = vector.load %arg2[%c0, %c0_0] : memref<128x128xbf16, #tpu.memory_space<vmem>>, vector<128x128xbf16>
    %c0_1 = arith.constant 0 : index
    %c0_2 = arith.constant 0 : index
    %c0_3 = arith.constant 0 : index
    %c0_4 = arith.constant 0 : index
    %1 = vector.load %arg1[%c0_1, %c0_2, %c0_3, %c0_4] : memref<1x4x196x128xbf16, #tpu.memory_space<vmem>>, vector<1x1x196x128xbf16>
    %2 = vector.shape_cast %1 : vector<1x1x196x128xbf16> to vector<196x128xbf16>
    %cst = arith.constant dense<0.000000e+00> : vector<196x128xf32>
    %3 = tpu.matmul %2, %0, %cst {dimension_numbers = #tpu.dot_dimension_numbers<[1], [0], [0], [1], [0, 0, 1, 1], [], []>} : vector<196x128xbf16>, vector<128x128xbf16>, vector<196x128xf32> -> vector<196x128xf32>
    %c0_5 = arith.constant 0 : index
    %c1 = arith.constant 1 : index
    %c0_6 = arith.constant 0 : index
    %c0_7 = arith.constant 0 : index
    %4 = vector.load %arg1[%c0_5, %c1, %c0_6, %c0_7] : memref<1x4x196x128xbf16, #tpu.memory_space<vmem>>, vector<1x1x196x128xbf16>
    %5 = vector.shape_cast %4 : vector<1x1x196x128xbf16> to vector<196x128xbf16>
    %cst_8 = arith.constant dense<0.000000e+00> : vector<196x128xf32>
    %6 = tpu.matmul %5, %0, %cst_8 {dimension_numbers = #tpu.dot_dimension_numbers<[1], [0], [0], [1], [0, 0, 1, 1], [], []>} : vector<196x128xbf16>, vector<128x128xbf16>, vector<196x128xf32> -> vector<196x128xf32>
    %7 = arith.maximumf %3, %6 : vector<196x128xf32>
    %c0_9 = arith.constant 0 : index
    %c2 = arith.constant 2 : index
    %c0_10 = arith.constant 0 : index
    %c0_11 = arith.constant 0 : index
    %8 = vector.load %arg1[%c0_9, %c2, %c0_10, %c0_11] : memref<1x4x196x128xbf16, #tpu.memory_space<vmem>>, vector<1x1x196x128xbf16>
    %9 = vector.shape_cast %8 : vector<1x1x196x128xbf16> to vector<196x128xbf16>
    %cst_12 = arith.constant dense<0.000000e+00> : vector<196x128xf32>
    %10 = tpu.matmul %9, %0, %cst_12 {dimension_numbers = #tpu.dot_dimension_numbers<[1], [0], [0], [1], [0, 0, 1, 1], [], []>} : vector<196x128xbf16>, vector<128x128xbf16>, vector<196x128xf32> -> vector<196x128xf32>
    %11 = arith.maximumf %7, %10 : vector<196x128xf32>
    %c0_13 = arith.constant 0 : index
    %c3 = arith.constant 3 : index
    %c0_14 = arith.constant 0 : index
    %c0_15 = arith.constant 0 : index
    %12 = vector.load %arg1[%c0_13, %c3, %c0_14, %c0_15] : memref<1x4x196x128xbf16, #tpu.memory_space<vmem>>, vector<1x1x196x128xbf16>
    %13 = vector.shape_cast %12 : vector<1x1x196x128xbf16> to vector<196x128xbf16>
    %cst_16 = arith.constant dense<0.000000e+00> : vector<196x128xf32>
    %14 = tpu.matmul %13, %0, %cst_16 {dimension_numbers = #tpu.dot_dimension_numbers<[1], [0], [0], [1], [0, 0, 1, 1], [], []>} : vector<196x128xbf16>, vector<128x128xbf16>, vector<196x128xf32> -> vector<196x128xf32>
    %15 = arith.maximumf %11, %14 : vector<196x128xf32>
    %c0_17 = arith.constant 0 : index
    %c0_18 = arith.constant 0 : index
    %16 = vector.load %arg3[%c0_17, %c0_18] : memref<1x128xf32, #tpu.memory_space<vmem>>, vector<1x128xf32>
    %17 = vector.broadcast %16 : vector<1x128xf32> to vector<196x128xf32>
    %18 = arith.addf %15, %17 : vector<196x128xf32>
    %cst_19 = arith.constant 0.000000e+00 : f32
    %19 = vector.broadcast %cst_19 : f32 to vector<196x128xf32>
    %20 = arith.maximumf %18, %19 : vector<196x128xf32>
    %21 = arith.truncf %20 : vector<196x128xf32> to vector<196x128xbf16>
    %c0_20 = arith.constant 0 : index
    %c0_21 = arith.constant 0 : index
    %c0_22 = arith.constant 0 : index
    %22 = vector.load %arg4[%c0_20, %c0_21, %c0_22] : memref<1x196x128xbf16, #tpu.memory_space<vmem>>, vector<1x196x128xbf16>
    %23 = vector.shape_cast %22 : vector<1x196x128xbf16> to vector<196x128xbf16>
    %24 = vector.shape_cast %21 : vector<196x128xbf16> to vector<1x196x128xbf16>
    tpu.vector_store %arg4[%c0_20, %c0_21, %c0_22], %24 {strides = array<i32>} : memref<1x196x128xbf16, #tpu.memory_space<vmem>>, vector<1x196x128xbf16>,
    return
  }
  func.func @transform_0(%arg0: i32) -> (i32, i32, i32, i32) {
    %c0_i32 = arith.constant 0 : i32
    %c0_i32_0 = arith.constant 0 : i32
    %c0_i32_1 = arith.constant 0 : i32
    %c0_i32_2 = arith.constant 0 : i32
    return %arg0, %c0_i32, %c0_i32_0, %c0_i32_1 : i32, i32, i32, i32
  }
  func.func @transform_1(%arg0: i32) -> (i32, i32) {
    %c0_i32 = arith.constant 0 : i32
    %c0_i32_0 = arith.constant 0 : i32
    %c0_i32_1 = arith.constant 0 : i32
    return %c0_i32, %c0_i32_0 : i32, i32
  }
  func.func @transform_2(%arg0: i32) -> (i32, i32) {
    %c0_i32 = arith.constant 0 : i32
    %c0_i32_0 = arith.constant 0 : i32
    %c0_i32_1 = arith.constant 0 : i32
    return %c0_i32, %c0_i32_0 : i32, i32
  }
  func.func @transform_3(%arg0: i32) -> (i32, i32, i32) {
    %c0_i32 = arith.constant 0 : i32
    %c0_i32_0 = arith.constant 0 : i32
    %c0_i32_1 = arith.constant 0 : i32
    return %arg0, %c0_i32, %c0_i32_0 : i32, i32, i32
  }
}

module attributes {stable_mosaic.version = 11 : i64} {
  func.func @_conv_relu_pool_kernel(%arg0: i32, %arg1: memref<1x4x25x256xbf16, #tpu.memory_space<vmem>>, %arg2: memref<256x128xbf16, #tpu.memory_space<vmem>>, %arg3: memref<1x128xf32, #tpu.memory_space<vmem>>, %arg4: memref<1x25x128xbf16, #tpu.memory_space<vmem>>) attributes {dimension_semantics = [#tpu.dimension_semantics<parallel>], iteration_bounds = array<i64: 2>, scalar_prefetch = 0 : i64, scratch_operands = 0 : i64, tpu.core_type = #tpu.core_type<tc>, window_params = [{transform_indices = @transform_0, window_bounds = array<i64: 1, 4, 25, 256>}, {pipeline_mode = #tpu.pipeline_mode<synchronous>, transform_indices = @transform_1, window_bounds = array<i64: 256, 128>}, {pipeline_mode = #tpu.pipeline_mode<synchronous>, transform_indices = @transform_2, window_bounds = array<i64: 1, 128>}, {transform_indices = @transform_3, window_bounds = array<i64: 1, 25, 128>}]} {
    %c0 = arith.constant 0 : index
    %c0_0 = arith.constant 0 : index
    %0 = vector.load %arg2[%c0, %c0_0] : memref<256x128xbf16, #tpu.memory_space<vmem>>, vector<256x128xbf16>
    %c0_1 = arith.constant 0 : index
    %c0_2 = arith.constant 0 : index
    %c0_3 = arith.constant 0 : index
    %c0_4 = arith.constant 0 : index
    %1 = vector.load %arg1[%c0_1, %c0_2, %c0_3, %c0_4] : memref<1x4x25x256xbf16, #tpu.memory_space<vmem>>, vector<1x1x25x256xbf16>
    %2 = vector.shape_cast %1 : vector<1x1x25x256xbf16> to vector<25x256xbf16>
    %cst = arith.constant dense<0.000000e+00> : vector<25x128xf32>
    %3 = tpu.matmul %2, %0, %cst {dimension_numbers = #tpu.dot_dimension_numbers<[1], [0], [0], [1], [0, 0, 1, 1], [], []>} : vector<25x256xbf16>, vector<256x128xbf16>, vector<25x128xf32> -> vector<25x128xf32>
    %c0_5 = arith.constant 0 : index
    %c1 = arith.constant 1 : index
    %c0_6 = arith.constant 0 : index
    %c0_7 = arith.constant 0 : index
    %4 = vector.load %arg1[%c0_5, %c1, %c0_6, %c0_7] : memref<1x4x25x256xbf16, #tpu.memory_space<vmem>>, vector<1x1x25x256xbf16>
    %5 = vector.shape_cast %4 : vector<1x1x25x256xbf16> to vector<25x256xbf16>
    %cst_8 = arith.constant dense<0.000000e+00> : vector<25x128xf32>
    %6 = tpu.matmul %5, %0, %cst_8 {dimension_numbers = #tpu.dot_dimension_numbers<[1], [0], [0], [1], [0, 0, 1, 1], [], []>} : vector<25x256xbf16>, vector<256x128xbf16>, vector<25x128xf32> -> vector<25x128xf32>
    %7 = arith.maximumf %3, %6 : vector<25x128xf32>
    %c0_9 = arith.constant 0 : index
    %c2 = arith.constant 2 : index
    %c0_10 = arith.constant 0 : index
    %c0_11 = arith.constant 0 : index
    %8 = vector.load %arg1[%c0_9, %c2, %c0_10, %c0_11] : memref<1x4x25x256xbf16, #tpu.memory_space<vmem>>, vector<1x1x25x256xbf16>
    %9 = vector.shape_cast %8 : vector<1x1x25x256xbf16> to vector<25x256xbf16>
    %cst_12 = arith.constant dense<0.000000e+00> : vector<25x128xf32>
    %10 = tpu.matmul %9, %0, %cst_12 {dimension_numbers = #tpu.dot_dimension_numbers<[1], [0], [0], [1], [0, 0, 1, 1], [], []>} : vector<25x256xbf16>, vector<256x128xbf16>, vector<25x128xf32> -> vector<25x128xf32>
    %11 = arith.maximumf %7, %10 : vector<25x128xf32>
    %c0_13 = arith.constant 0 : index
    %c3 = arith.constant 3 : index
    %c0_14 = arith.constant 0 : index
    %c0_15 = arith.constant 0 : index
    %12 = vector.load %arg1[%c0_13, %c3, %c0_14, %c0_15] : memref<1x4x25x256xbf16, #tpu.memory_space<vmem>>, vector<1x1x25x256xbf16>
    %13 = vector.shape_cast %12 : vector<1x1x25x256xbf16> to vector<25x256xbf16>
    %cst_16 = arith.constant dense<0.000000e+00> : vector<25x128xf32>
    %14 = tpu.matmul %13, %0, %cst_16 {dimension_numbers = #tpu.dot_dimension_numbers<[1], [0], [0], [1], [0, 0, 1, 1], [], []>} : vector<25x256xbf16>, vector<256x128xbf16>, vector<25x128xf32> -> vector<25x128xf32>
    %15 = arith.maximumf %11, %14 : vector<25x128xf32>
    %c0_17 = arith.constant 0 : index
    %c0_18 = arith.constant 0 : index
    %16 = vector.load %arg3[%c0_17, %c0_18] : memref<1x128xf32, #tpu.memory_space<vmem>>, vector<1x128xf32>
    %17 = vector.broadcast %16 : vector<1x128xf32> to vector<25x128xf32>
    %18 = arith.addf %15, %17 : vector<25x128xf32>
    %cst_19 = arith.constant 0.000000e+00 : f32
    %19 = vector.broadcast %cst_19 : f32 to vector<25x128xf32>
    %20 = arith.maximumf %18, %19 : vector<25x128xf32>
    %21 = arith.truncf %20 : vector<25x128xf32> to vector<25x128xbf16>
    %c0_20 = arith.constant 0 : index
    %c0_21 = arith.constant 0 : index
    %c0_22 = arith.constant 0 : index
    %22 = vector.load %arg4[%c0_20, %c0_21, %c0_22] : memref<1x25x128xbf16, #tpu.memory_space<vmem>>, vector<1x25x128xbf16>
    %23 = vector.shape_cast %22 : vector<1x25x128xbf16> to vector<25x128xbf16>
    %24 = vector.shape_cast %21 : vector<25x128xbf16> to vector<1x25x128xbf16>
    tpu.vector_store %arg4[%c0_20, %c0_21, %c0_22], %24 {strides = array<i32>} : memref<1x25x128xbf16, #tpu.memory_space<vmem>>, vector<1x25x128xbf16>,
    return
  }
  func.func @transform_0(%arg0: i32) -> (i32, i32, i32, i32) {
    %c0_i32 = arith.constant 0 : i32
    %c0_i32_0 = arith.constant 0 : i32
    %c0_i32_1 = arith.constant 0 : i32
    %c0_i32_2 = arith.constant 0 : i32
    return %arg0, %c0_i32, %c0_i32_0, %c0_i32_1 : i32, i32, i32, i32
  }
  func.func @transform_1(%arg0: i32) -> (i32, i32) {
    %c0_i32 = arith.constant 0 : i32
    %c0_i32_0 = arith.constant 0 : i32
    %c0_i32_1 = arith.constant 0 : i32
    return %c0_i32, %c0_i32_0 : i32, i32
  }
  func.func @transform_2(%arg0: i32) -> (i32, i32) {
    %c0_i32 = arith.constant 0 : i32
    %c0_i32_0 = arith.constant 0 : i32
    %c0_i32_1 = arith.constant 0 : i32
    return %c0_i32, %c0_i32_0 : i32, i32
  }
  func.func @transform_3(%arg0: i32) -> (i32, i32, i32) {
    %c0_i32 = arith.constant 0 : i32
    %c0_i32_0 = arith.constant 0 : i32
    %c0_i32_1 = arith.constant 0 : i32
    return %arg0, %c0_i32, %c0_i32_0 : i32, i32, i32
  }
}

module attributes {stable_mosaic.version = 11 : i64} {
  func.func @_fc_fused_kernel(%arg0: i32, %arg1: memref<8x512xbf16, #tpu.memory_space<vmem>>, %arg2: memref<512x128xbf16, #tpu.memory_space<vmem>>, %arg3: memref<1x128xf32, #tpu.memory_space<vmem>>, %arg4: memref<128x128xbf16, #tpu.memory_space<vmem>>, %arg5: memref<1x128xf32, #tpu.memory_space<vmem>>, %arg6: memref<8x128xf32, #tpu.memory_space<vmem>>) attributes {dimension_semantics = [#tpu.dimension_semantics<parallel>], iteration_bounds = array<i64: 1>, scalar_prefetch = 0 : i64, scratch_operands = 0 : i64, tpu.core_type = #tpu.core_type<tc>, window_params = [{transform_indices = @transform_0, window_bounds = array<i64: 8, 512>}, {pipeline_mode = #tpu.pipeline_mode<synchronous>, transform_indices = @transform_1, window_bounds = array<i64: 512, 128>}, {pipeline_mode = #tpu.pipeline_mode<synchronous>, transform_indices = @transform_2, window_bounds = array<i64: 1, 128>}, {pipeline_mode = #tpu.pipeline_mode<synchronous>, transform_indices = @transform_3, window_bounds = array<i64: 128, 128>}, {pipeline_mode = #tpu.pipeline_mode<synchronous>, transform_indices = @transform_4, window_bounds = array<i64: 1, 128>}, {transform_indices = @transform_5, window_bounds = array<i64: 8, 128>}]} {
    %c0 = arith.constant 0 : index
    %c0_0 = arith.constant 0 : index
    %0 = vector.load %arg1[%c0, %c0_0] : memref<8x512xbf16, #tpu.memory_space<vmem>>, vector<8x512xbf16>
    %c0_1 = arith.constant 0 : index
    %c0_2 = arith.constant 0 : index
    %1 = vector.load %arg2[%c0_1, %c0_2] : memref<512x128xbf16, #tpu.memory_space<vmem>>, vector<512x128xbf16>
    %cst = arith.constant dense<0.000000e+00> : vector<8x128xf32>
    %2 = tpu.matmul %0, %1, %cst {dimension_numbers = #tpu.dot_dimension_numbers<[1], [0], [0], [1], [0, 0, 1, 1], [], []>} : vector<8x512xbf16>, vector<512x128xbf16>, vector<8x128xf32> -> vector<8x128xf32>
    %c0_3 = arith.constant 0 : index
    %c0_4 = arith.constant 0 : index
    %3 = vector.load %arg3[%c0_3, %c0_4] : memref<1x128xf32, #tpu.memory_space<vmem>>, vector<1x128xf32>
    %4 = vector.broadcast %3 : vector<1x128xf32> to vector<8x128xf32>
    %5 = arith.addf %2, %4 : vector<8x128xf32>
    %cst_5 = arith.constant 0.000000e+00 : f32
    %6 = vector.broadcast %cst_5 : f32 to vector<8x128xf32>
    %7 = arith.maximumf %5, %6 : vector<8x128xf32>
    %8 = arith.truncf %7 : vector<8x128xf32> to vector<8x128xbf16>
    %c0_6 = arith.constant 0 : index
    %c0_7 = arith.constant 0 : index
    %9 = vector.load %arg4[%c0_6, %c0_7] : memref<128x128xbf16, #tpu.memory_space<vmem>>, vector<128x128xbf16>
    %cst_8 = arith.constant dense<0.000000e+00> : vector<8x128xf32>
    %10 = tpu.matmul %8, %9, %cst_8 {dimension_numbers = #tpu.dot_dimension_numbers<[1], [0], [0], [1], [0, 0, 1, 1], [], []>} : vector<8x128xbf16>, vector<128x128xbf16>, vector<8x128xf32> -> vector<8x128xf32>
    %c0_9 = arith.constant 0 : index
    %c0_10 = arith.constant 0 : index
    %11 = vector.load %arg5[%c0_9, %c0_10] : memref<1x128xf32, #tpu.memory_space<vmem>>, vector<1x128xf32>
    %12 = vector.broadcast %11 : vector<1x128xf32> to vector<8x128xf32>
    %13 = arith.addf %10, %12 : vector<8x128xf32>
    %c0_11 = arith.constant 0 : index
    %c0_12 = arith.constant 0 : index
    %14 = vector.load %arg6[%c0_11, %c0_12] : memref<8x128xf32, #tpu.memory_space<vmem>>, vector<8x128xf32>
    tpu.vector_store %arg6[%c0_11, %c0_12], %13 {strides = array<i32>} : memref<8x128xf32, #tpu.memory_space<vmem>>, vector<8x128xf32>,
    return
  }
  func.func @transform_0(%arg0: i32) -> (i32, i32) {
    %c0_i32 = arith.constant 0 : i32
    %c0_i32_0 = arith.constant 0 : i32
    return %arg0, %c0_i32 : i32, i32
  }
  func.func @transform_1(%arg0: i32) -> (i32, i32) {
    %c0_i32 = arith.constant 0 : i32
    %c0_i32_0 = arith.constant 0 : i32
    %c0_i32_1 = arith.constant 0 : i32
    return %c0_i32, %c0_i32_0 : i32, i32
  }
  func.func @transform_2(%arg0: i32) -> (i32, i32) {
    %c0_i32 = arith.constant 0 : i32
    %c0_i32_0 = arith.constant 0 : i32
    %c0_i32_1 = arith.constant 0 : i32
    return %c0_i32, %c0_i32_0 : i32, i32
  }
  func.func @transform_3(%arg0: i32) -> (i32, i32) {
    %c0_i32 = arith.constant 0 : i32
    %c0_i32_0 = arith.constant 0 : i32
    %c0_i32_1 = arith.constant 0 : i32
    return %c0_i32, %c0_i32_0 : i32, i32
  }
  func.func @transform_4(%arg0: i32) -> (i32, i32) {
    %c0_i32 = arith.constant 0 : i32
    %c0_i32_0 = arith.constant 0 : i32
    %c0_i32_1 = arith.constant 0 : i32
    return %c0_i32, %c0_i32_0 : i32, i32
  }
  func.func @transform_5(%arg0: i32) -> (i32, i32) {
    %c0_i32 = arith.constant 0 : i32
    %c0_i32_0 = arith.constant 0 : i32
    return %arg0, %c0_i32 : i32, i32
  }
}

</mosaic_0001>

<llo_original>
// kernel: net_forward.3
$region0: #{net_forward.3}
  #allocation0 [shape = 'u32[]', space=smem, size = 0x4, offset = 0x4, fixed_abs, tag = 'smem constant byte address 0x4 - core index']
  #allocation1 [shape = 'u32[144,128]{1,0:T(1,128)}', space=vmem, size = 0x12000, scoped, tag = 'internal scratch']
  %s0 = inlined_call_operand.vmem [shape: bf16[2,4,196,128], index: 0, kind: input, shape index: {}]
  %s1 = inlined_call_operand.vmem [shape: bf16[128,128], index: 1, kind: input, shape index: {}]
  %s2 = inlined_call_operand.vmem [shape: f32[1,128], index: 2, kind: input, shape index: {}]
  %s3 = inlined_call_operand.vmem [shape: bf16[2,196,128], index: 3, kind: output, shape index: {}]
  %s4 = sld [smem:[#allocation0]]
  $region45: #{net_forward.3} parent=0
    _
  %s6 = ssub.s32 1, %s4
  %s7 = scalar_select 0, %s6, %s4
  loop: start=0, step=1, limit=4
  $region2: #{net_forward.3} parent=0 // loop_pre_header
    _
  $region3: #{net_forward.3} parent=0 // loop_header
    %s9 = sphi 0, %s13
    %p10 = scmp.ge.s32.totalorder %s9, 4
    %s19 = sphi 0, %s21
    %s22 = sphi 0, %s19
    %s23 = sphi 0, %s22
    %s39 = sphi 0, %s23
    %s43 = sphi 0, %s43
    %s45 = sphi 0, %s43
    %s46 = sphi 0, %s45
    %s60 = sphi 0, %s46
    %s64 = sphi 0, %s64
    %s66 = sphi 0, %s64
    %s67 = sphi 0, %s66
    %s81 = sphi 0, %s67
    %s87 = sphi 0, %s89
    %s90 = sphi 0, %s87
    %s91 = sphi 0, %s90
    %s107 = sphi 0, %s91
  $region4: #{net_forward.3} parent=0 // loop_header_branch
    %12 = sbr.rel (%p10) target = $region8
  $region5: #{net_forward.3} parent=0 // loop_body
    %s14 = ssub.s32 %s9, 1
    %s15 = ssub.s32 %s9, 2
    %s16 = sadd.s32 %s9, 1
    %s17 = ssub.s32 %s9, %s16
    %p18 = scmp.eq.s32.totalorder %s17, 0
    %s20 = sadd.s32 %s19, 1
    %s21 = scalar_select %p18, %s19, %s20
    %p24 = pneg %p18
    %p25 = scmp.eq.s32.totalorder %s9, 1
    %p26 = por %p24, %p25
    %p27 = scmp.ne.s32.totalorder %s19, %s22
    %p28 = scmp.eq.s32.totalorder %s9, 0
    %p29 = por %p27, %p28
    %p30 = scmp.ne.s32.totalorder %s19, %s22
    %p31 = scmp.eq.s32.totalorder %s14, 1
    %p32 = por %p30, %p31
    %p33 = scmp.ne.s32.totalorder %s22, %s23
    %p34 = scmp.eq.s32.totalorder %s14, 0
    %p35 = por %p33, %p34
    %p36 = scmp.ne.s32.totalorder %s22, %s23
    %p37 = scmp.eq.s32.totalorder %s15, 1
    %p38 = por %p36, %p37
    %p40 = scmp.ne.s32.totalorder %s23, %s39
    %p41 = scmp.eq.s32.totalorder %s15, 0
    %p42 = por %p40, %p41
    %s44 = sadd.s32 %s43, 1
    %p47 = scmp.eq.s32.totalorder %s9, 1
    %p48 = scmp.ne.s32.totalorder %s43, %s45
    %p49 = scmp.eq.s32.totalorder %s9, 0
    %p50 = por %p48, %p49
    %p51 = scmp.ne.s32.totalorder %s43, %s45
    %p52 = scmp.eq.s32.totalorder %s14, 1
    %p53 = por %p51, %p52
    %p54 = scmp.ne.s32.totalorder %s45, %s46
    %p55 = scmp.eq.s32.totalorder %s14, 0
    %p56 = por %p54, %p55
    %p57 = scmp.ne.s32.totalorder %s45, %s46
    %p58 = scmp.eq.s32.totalorder %s15, 1
    %p59 = por %p57, %p58
    %p61 = scmp.ne.s32.totalorder %s46, %s60
    %p62 = scmp.eq.s32.totalorder %s15, 0
    %p63 = por %p61, %p62
    %s65 = sadd.s32 %s64, 1
    %p68 = scmp.eq.s32.totalorder %s9, 1
    %p69 = scmp.ne.s32.totalorder %s64, %s66
    %p70 = scmp.eq.s32.totalorder %s9, 0
    %p71 = por %p69, %p70
    %p72 = scmp.ne.s32.totalorder %s64, %s66
    %p73 = scmp.eq.s32.totalorder %s14, 1
    %p74 = por %p72, %p73
    %p75 = scmp.ne.s32.totalorder %s66, %s67
    %p76 = scmp.eq.s32.totalorder %s14, 0
    %p77 = por %p75, %p76
    %p78 = scmp.ne.s32.totalorder %s66, %s67
    %p79 = scmp.eq.s32.totalorder %s15, 1
    %p80 = por %p78, %p79
    %p82 = scmp.ne.s32.totalorder %s67, %s81
    %p83 = scmp.eq.s32.totalorder %s15, 0
    %p84 = por %p82, %p83
    %s85 = ssub.s32 %s9, %s16
    %p86 = scmp.eq.s32.totalorder %s85, 0
    %s88 = sadd.s32 %s87, 1
    %s89 = scalar_select %p86, %s87, %s88
    %p92 = pneg %p86
    %p93 = scmp.eq.s32.totalorder %s9, 1
    %p94 = por %p92, %p93
    %p95 = scmp.ne.s32.totalorder %s87, %s90
    %p96 = scmp.eq.s32.totalorder %s9, 0
    %p97 = por %p95, %p96
    %p98 = scmp.ne.s32.totalorder %s87, %s90
    %p99 = scmp.eq.s32.totalorder %s14, 1
    %p100 = por %p98, %p99
    %p101 = scmp.ne.s32.totalorder %s90, %s91
    %p102 = scmp.eq.s32.totalorder %s14, 0
    %p103 = por %p101, %p102
    %p104 = scmp.ne.s32.totalorder %s90, %s91
    %p105 = scmp.eq.s32.totalorder %s15, 1
    %p106 = por %p104, %p105
    %p108 = scmp.ne.s32.totalorder %s91, %s107
    %p109 = scmp.eq.s32.totalorder %s15, 0
    %p110 = por %p108, %p109
    %p111 = scmp.le.s32.totalorder 1, %s9
    %p112 = scmp.lt.s32.totalorder %s9, 3
    %p113 = pnand %p111, %p112
    %p114 = pneg %p113
    // Predicated region
    $region9: #{net_forward.3} parent=5 // pred_check
      _
    $region10: #{net_forward.3} parent=5 // pred_check_branch
      %116 = sbr.rel (%p113) target = $region12
    $region11: #{net_forward.3} parent=5 // pred_region
      %s117 = ssub.s32 %s9, 1
      // Predicated region
      $region13: #{net_forward.3} parent=11 // pred_check
        %p118 = pneg %p56
      $region14: #{net_forward.3} parent=11 // pred_check_branch
        %120 = sbr.rel (%p118) target = $region16
      $region15: #{net_forward.3} parent=11 // pred_region
        _
      $region16: #{net_forward.3} parent=11 // pred_fallthru
        _
      // Predicated region
      $region17: #{net_forward.3} parent=11 // pred_check
        %p121 = pneg %p77
      $region18: #{net_forward.3} parent=11 // pred_check_branch
        %123 = sbr.rel (%p121) target = $region20
      $region19: #{net_forward.3} parent=11 // pred_region
        _
      $region20: #{net_forward.3} parent=11 // pred_fallthru
        _
    $region12: #{net_forward.3} parent=5 // pred_fallthru
      _
    %p124 = scmp.lt.s32.totalorder %s9, 2
    // Predicated region
    $region21: #{net_forward.3} parent=5 // pred_check
      %p125 = pneg %p124
    $region22: #{net_forward.3} parent=5 // pred_check_branch
      %127 = sbr.rel (%p125) target = $region24
    $region23: #{net_forward.3} parent=5 // pred_region
      // Predicated region
      $region25: #{net_forward.3} parent=23 // pred_check
        %p128 = pneg %p29
      $region26: #{net_forward.3} parent=23 // pred_check_branch
        %130 = sbr.rel (%p128) target = $region28
      $region27: #{net_forward.3} parent=23 // pred_region
        %p131 = scmp.lt.s32.totalorder %s9, 1
        %s132 = scalar_select %p131, %s9, 1
        %s133 = smul.addr %s132, 100
        %s134 = smul.addr %s133, 4
        %s135 = scalar_lea.vmem %s0, %s134
      $region28: #{net_forward.3} parent=23 // pred_fallthru
        _
    $region24: #{net_forward.3} parent=5 // pred_fallthru
      _
    %p136 = scmp.le.s32.totalorder 1, %s9
    %p137 = scmp.lt.s32.totalorder %s9, 3
    %p138 = pnand %p136, %p137
    %p139 = pneg %p138
    // Predicated region
    $region29: #{net_forward.3} parent=5 // pred_check
      _
    $region30: #{net_forward.3} parent=5 // pred_check_branch
      %141 = sbr.rel (%p138) target = $region32
    $region31: #{net_forward.3} parent=5 // pred_region
      %s142 = ssub.s32 %s9, 1
      %p143 = scmp.lt.s32.totalorder %s14, 1
      %s144 = scalar_select %p143, %s14, 1
      %s145 = smul.addr %s144, 100
      %s146 = smul.addr %s145, 4
      %s147 = scalar_lea.vmem %s0, %s146
      %p148 = pneg %p35
      %p149 = pneg %p32
      %p150 = pneg %p56
      %p151 = pneg %p53
      %p152 = pneg %p77
      %p153 = pneg %p74
      %p154 = pneg %p103
      %p155 = pneg %p100
      %p156 = scmp.lt.s32.totalorder %s14, 1
      %s157 = scalar_select %p156, %s14, 1
      %s158 = smul.addr %s157, 25
      %s159 = smul.addr %s158, 4
      %s160 = scalar_lea.vmem %s3, %s159
      %p161 = scmp.lt.s32.totalorder %s14, 1
      %s162 = scalar_select %p161, %s14, 1
      %s163 = smul.addr %s162, 100
      %s164 = smul.addr %s163, 4
      %s165 = scalar_lea.vmem %s0, %s164
      %p166 = scmp.lt.s32.totalorder %s14, 1
      %s167 = scalar_select %p166, %s14, 1
      %s168 = smul.addr %s167, 25
      %s169 = smul.addr %s168, 4
      %s170 = scalar_lea.vmem %s3, %s169
      %v172 = vld [vmem:[%s1] sm:$0xf]
      %v173 = vld [vmem:[%s1 + $0x4] sm:$0xf]
      %v174 = vld [vmem:[%s1 + $0x8] sm:$0xf]
      %v175 = vld [vmem:[%s1 + $0xc] sm:$0xf]
      %v176 = vld [vmem:[%s1 + $0x10] sm:$0xf]
      %v177 = vld [vmem:[%s1 + $0x14] sm:$0xf]
      %v178 = vld [vmem:[%s1 + $0x18] sm:$0xf]
      %v179 = vld [vmem:[%s1 + $0x1c] sm:$0xf]
      %v180 = vld [vmem:[%s1 + $0x20] sm:$0xf]
      %v181 = vld [vmem:[%s1 + $0x24] sm:$0xf]
      %v182 = vld [vmem:[%s1 + $0x28] sm:$0xf]
      %v183 = vld [vmem:[%s1 + $0x2c] sm:$0xf]
      %v184 = vld [vmem:[%s1 + $0x30] sm:$0xf]
      %v185 = vld [vmem:[%s1 + $0x34] sm:$0xf]
      %v186 = vld [vmem:[%s1 + $0x38] sm:$0xf]
      %v187 = vld [vmem:[%s1 + $0x3c] sm:$0xf]
      %v188 = vld [vmem:[%s165] sm:$0xf]
      %v189 = vld [vmem:[%s165 + $0x4] sm:$0xf]
      %v190 = vld [vmem:[%s165 + $0x8] sm:$0xf]
      %v191 = vld [vmem:[%s165 + $0xc] sm:$0xf]
      %v192 = vld [vmem:[%s165 + $0x10] sm:$0xf]
      %v193 = vld [vmem:[%s165 + $0x14] sm:$0xf]
      %v194 = vld [vmem:[%s165 + $0x18] sm:$0xf]
      %v195 = vld [vmem:[%s165 + $0x1c] sm:$0xf]
      %v196 = vld [vmem:[%s165 + $0x20] sm:$0xf]
      %v197 = vld [vmem:[%s165 + $0x24] sm:$0xf]
      %v198 = vld [vmem:[%s165 + $0x28] sm:$0xf]
      %v199 = vld [vmem:[%s165 + $0x2c] sm:$0xf]
      %v200 = vld [vmem:[%s165 + $0x30] sm:$0xf]
      %v201 = vld [vmem:[%s165 + $0x34] sm:$0xf]
      %v202 = vld [vmem:[%s165 + $0x38] sm:$0xf]
      %v203 = vld [vmem:[%s165 + $0x3c] sm:$0xf]
      %v204 = vld [vmem:[%s165 + $0x40] sm:$0xf]
      %v205 = vld [vmem:[%s165 + $0x44] sm:$0xf]
      %v206 = vld [vmem:[%s165 + $0x48] sm:$0xf]
      %v207 = vld [vmem:[%s165 + $0x4c] sm:$0xf]
      %v208 = vld [vmem:[%s165 + $0x50] sm:$0xf]
      %v209 = vld [vmem:[%s165 + $0x54] sm:$0xf]
      %v210 = vld [vmem:[%s165 + $0x58] sm:$0xf]
      %v211 = vld [vmem:[%s165 + $0x5c] sm:$0xf]
      %v212 = vld [vmem:[%s165 + $0x60] sm:$0x3]
      %v238 = vunpack.c.l.b16 %v188
      %v239 = vunpack.c.l.b16 %v189
      %v240 = vunpack.c.l.b16 %v190
      %v241 = vunpack.c.l.b16 %v191
      %v242 = vunpack.c.l.b16 %v192
      %v243 = vunpack.c.l.b16 %v193
      %v244 = vunpack.c.l.b16 %v194
      %v245 = vunpack.c.l.b16 %v195
      %v246 = vunpack.c.l.b16 %v196
      %v247 = vunpack.c.l.b16 %v197
      %v248 = vunpack.c.l.b16 %v198
      %v249 = vunpack.c.l.b16 %v199
      %v250 = vunpack.c.l.b16 %v200
      %v251 = vunpack.c.l.b16 %v201
      %v252 = vunpack.c.l.b16 %v202
      %v253 = vunpack.c.l.b16 %v203
      %v254 = vunpack.c.l.b16 %v204
      %v255 = vunpack.c.l.b16 %v205
      %v256 = vunpack.c.l.b16 %v206
      %v257 = vunpack.c.l.b16 %v207
      %v258 = vunpack.c.l.b16 %v208
      %v259 = vunpack.c.l.b16 %v209
      %v260 = vunpack.c.l.b16 %v210
      %v261 = vunpack.c.l.b16 %v211
      %v262 = vunpack.c.l.b16 %v212
      %v263 = vpack.c.b16 %v239, %v238
      %v264 = vpack.c.b16 %v241, %v240
      %v265 = vpack.c.b16 %v243, %v242
      %v266 = vpack.c.b16 %v245, %v244
      %v267 = vpack.c.b16 %v247, %v246
      %v268 = vpack.c.b16 %v249, %v248
      %v269 = vpack.c.b16 %v251, %v250
      %v270 = vpack.c.b16 %v253, %v252
      %v271 = vpack.c.b16 %v255, %v254
      %v272 = vpack.c.b16 %v257, %v256
      %v273 = vpack.c.b16 %v259, %v258
      %v274 = vpack.c.b16 %v261, %v260
      %v275 = vpack.c.b16 %v262, %v262
      %v305 = vunpack.c.l.b16 %v172
      %v306 = vunpack.c.l.b16 %v173
      %v307 = vunpack.c.l.b16 %v174
      %v308 = vunpack.c.l.b16 %v175
      %v309 = vunpack.c.l.b16 %v176
      %v310 = vunpack.c.l.b16 %v177
      %v311 = vunpack.c.l.b16 %v178
      %v312 = vunpack.c.l.b16 %v179
      %v313 = vunpack.c.l.b16 %v180
      %v314 = vunpack.c.l.b16 %v181
      %v315 = vunpack.c.l.b16 %v182
      %v316 = vunpack.c.l.b16 %v183
      %v317 = vunpack.c.l.b16 %v184
      %v318 = vunpack.c.l.b16 %v185
      %v319 = vunpack.c.l.b16 %v186
      %v320 = vunpack.c.l.b16 %v187
      %v321 = vpack.c.b16 %v306, %v305
      %v322 = vpack.c.b16 %v308, %v307
      %v323 = vpack.c.b16 %v310, %v309
      %v324 = vpack.c.b16 %v312, %v311
      %v325 = vpack.c.b16 %v314, %v313
      %v326 = vpack.c.b16 %v316, %v315
      %v327 = vpack.c.b16 %v318, %v317
      %v328 = vpack.c.b16 %v320, %v319
      %337 = vmatprep.subr.bf16.mxu0 0
      %338 = vmatpush1.bf16.msra.mxu0 %v321
      %339 = vmatprep.subr.bf16.mxu0 0
      %340 = vmatpush1.bf16.msra.mxu0 %v322
      %341 = vmatprep.subr.bf16.mxu0 0
      %342 = vmatpush1.bf16.msra.mxu0 %v323
      %343 = vmatprep.subr.bf16.mxu0 0
      %344 = vmatpush1.bf16.msra.mxu0 %v324
      %345 = vmatprep.subr.bf16.mxu0 0
      %346 = vmatpush1.bf16.msra.mxu0 %v325
      %347 = vmatprep.subr.bf16.mxu0 0
      %348 = vmatpush1.bf16.msra.mxu0 %v326
      %349 = vmatprep.subr.bf16.mxu0 0
      %350 = vmatpush1.bf16.msra.mxu0 %v327
      %351 = vmatprep.subr.bf16.mxu0 0
      %352 = vmatpush1.bf16.msra.mxu0 %v328
      %353 = vmatprep.subr.bf16.mxu0 0
      %354 = vmatpush1.bf16.msra.mxu0 0
      %355 = vmatprep.subr.bf16.mxu0 0
      %356 = vmatpush1.bf16.msra.mxu0 0
      %357 = vmatprep.subr.bf16.mxu0 0
      %358 = vmatpush1.bf16.msra.mxu0 0
      %359 = vmatprep.subr.bf16.mxu0 0
      %360 = vmatpush1.bf16.msra.mxu0 0
      %361 = vmatprep.subr.bf16.mxu0 0
      %362 = vmatpush1.bf16.msra.mxu0 0
      %363 = vmatprep.subr.bf16.mxu0 0
      %364 = vmatpush1.bf16.msra.mxu0 0
      %365 = vmatprep.subr.bf16.mxu0 0
      %366 = vmatpush1.bf16.msra.mxu0 0
      %367 = vmatprep.subr.bf16.mxu0 0
      %368 = vmatpush1.bf16.msra.mxu0 0
      %369 = vmatprep.mubr.bf16.mxu0 0
      %370 = vmatmul.mubr.bf16.gmra.mrb[0].mxu0 %v263
      %v371 = vpop.f32.mrb[0].mxu0
      %v372 = vadd.f32 0.0, %v371
      %v373 = vpop.f32.mrb[0].mxu0
      %v374 = vpop.f32.mrb[0].mxu0
      %v375 = vadd.f32 0.0, %v374
      %v376 = vpop.f32.mrb[0].mxu0
      %377 = vmatprep.mubr.bf16.mxu0 0
      %378 = vmatmul.mubr.bf16.gmra.mrb[0].mxu0 %v264
      %v379 = vpop.f32.mrb[0].mxu0
      %v380 = vadd.f32 0.0, %v379
      %v381 = vpop.f32.mrb[0].mxu0
      %v382 = vpop.f32.mrb[0].mxu0
      %v383 = vadd.f32 0.0, %v382
      %v384 = vpop.f32.mrb[0].mxu0
      %385 = vmatprep.mubr.bf16.mxu0 0
      %386 = vmatmul.mubr.bf16.gmra.mrb[0].mxu0 %v265
      %v387 = vpop.f32.mrb[0].mxu0
      %v388 = vadd.f32 0.0, %v387
      %v389 = vpop.f32.mrb[0].mxu0
      %v390 = vpop.f32.mrb[0].mxu0
      %v391 = vadd.f32 0.0, %v390
      %v392 = vpop.f32.mrb[0].mxu0
      %393 = vmatprep.mubr.bf16.mxu0 0
      %394 = vmatmul.mubr.bf16.gmra.mrb[0].mxu0 %v266
      %v395 = vpop.f32.mrb[0].mxu0
      %v396 = vadd.f32 0.0, %v395
      %v397 = vpop.f32.mrb[0].mxu0
      %v398 = vpop.f32.mrb[0].mxu0
      %v399 = vadd.f32 0.0, %v398
      %v400 = vpop.f32.mrb[0].mxu0
      %401 = vmatprep.mubr.bf16.mxu0 0
      %402 = vmatmul.mubr.bf16.gmra.mrb[0].mxu0 %v267
      %v403 = vpop.f32.mrb[0].mxu0
      %v404 = vadd.f32 0.0, %v403
      %v405 = vpop.f32.mrb[0].mxu0
      %v406 = vpop.f32.mrb[0].mxu0
      %v407 = vadd.f32 0.0, %v406
      %v408 = vpop.f32.mrb[0].mxu0
      %409 = vmatprep.mubr.bf16.mxu0 0
      %410 = vmatmul.mubr.bf16.gmra.mrb[0].mxu0 %v268
      %v411 = vpop.f32.mrb[0].mxu0
      %v412 = vadd.f32 0.0, %v411
      %v413 = vpop.f32.mrb[0].mxu0
      %v414 = vpop.f32.mrb[0].mxu0
      %v415 = vadd.f32 0.0, %v414
      %v416 = vpop.f32.mrb[0].mxu0
      %417 = vmatprep.mubr.bf16.mxu0 0
      %418 = vmatmul.mubr.bf16.gmra.mrb[0].mxu0 %v269
      %v419 = vpop.f32.mrb[0].mxu0
      %v420 = vadd.f32 0.0, %v419
      %v421 = vpop.f32.mrb[0].mxu0
      %v422 = vpop.f32.mrb[0].mxu0
      %v423 = vadd.f32 0.0, %v422
      %v424 = vpop.f32.mrb[0].mxu0
      %425 = vmatprep.mubr.bf16.mxu0 0
      %426 = vmatmul.mubr.bf16.gmra.mrb[0].mxu0 %v270
      %v427 = vpop.f32.mrb[0].mxu0
      %v428 = vadd.f32 0.0, %v427
      %v429 = vpop.f32.mrb[0].mxu0
      %v430 = vpop.f32.mrb[0].mxu0
      %v431 = vadd.f32 0.0, %v430
      %v432 = vpop.f32.mrb[0].mxu0
      %433 = vmatprep.mubr.bf16.mxu0 0
      %434 = vmatmul.mubr.bf16.gmra.mrb[0].mxu0 %v271
      %v435 = vpop.f32.mrb[0].mxu0
      %v436 = vadd.f32 0.0, %v435
      %v437 = vpop.f32.mrb[0].mxu0
      %v438 = vpop.f32.mrb[0].mxu0
      %v439 = vadd.f32 0.0, %v438
      %v440 = vpop.f32.mrb[0].mxu0
      %441 = vmatprep.mubr.bf16.mxu0 0
      %442 = vmatmul.mubr.bf16.gmra.mrb[0].mxu0 %v272
      %v443 = vpop.f32.mrb[0].mxu0
      %v444 = vadd.f32 0.0, %v443
      %v445 = vpop.f32.mrb[0].mxu0
      %v446 = vpop.f32.mrb[0].mxu0
      %v447 = vadd.f32 0.0, %v446
      %v448 = vpop.f32.mrb[0].mxu0
      %449 = vmatprep.mubr.bf16.mxu0 0
      %450 = vmatmul.mubr.bf16.gmra.mrb[0].mxu0 %v273
      %v451 = vpop.f32.mrb[0].mxu0
      %v452 = vadd.f32 0.0, %v451
      %v453 = vpop.f32.mrb[0].mxu0
      %v454 = vpop.f32.mrb[0].mxu0
      %v455 = vadd.f32 0.0, %v454
      %v456 = vpop.f32.mrb[0].mxu0
      %457 = vmatprep.mubr.bf16.mxu0 0
      %458 = vmatmul.mubr.bf16.gmra.mrb[0].mxu0 %v274
      %v459 = vpop.f32.mrb[0].mxu0
      %v460 = vadd.f32 0.0, %v459
      %v461 = vpop.f32.mrb[0].mxu0
      %v462 = vpop.f32.mrb[0].mxu0
      %v463 = vadd.f32 0.0, %v462
      %v464 = vpop.f32.mrb[0].mxu0
      %465 = vmatprep.mubr.bf16.mxu0 0
      %466 = vmatmul.mubr.bf16.gmra.mrb[0].mxu0 %v275
      %v467 = vpop.f32.mrb[0].mxu0
      %v468 = vadd.f32 0.0, %v467
      %v469 = vpop.f32.mrb[0].mxu0
      %v470 = vpop.f32.mrb[0].mxu0
      %v471 = vpop.f32.mrb[0].mxu0
      %472 = vdwg.mxu0
      %s473 = scalar_lea.vmem %s165, 100
      %v474 = vld [vmem:[%s473] sm:$0xf]
      %v475 = vld [vmem:[%s473 + $0x4] sm:$0xf]
      %v476 = vld [vmem:[%s473 + $0x8] sm:$0xf]
      %v477 = vld [vmem:[%s473 + $0xc] sm:$0xf]
      %v478 = vld [vmem:[%s473 + $0x10] sm:$0xf]
      %v479 = vld [vmem:[%s473 + $0x14] sm:$0xf]
      %v480 = vld [vmem:[%s473 + $0x18] sm:$0xf]
      %v481 = vld [vmem:[%s473 + $0x1c] sm:$0xf]
      %v482 = vld [vmem:[%s473 + $0x20] sm:$0xf]
      %v483 = vld [vmem:[%s473 + $0x24] sm:$0xf]
      %v484 = vld [vmem:[%s473 + $0x28] sm:$0xf]
      %v485 = vld [vmem:[%s473 + $0x2c] sm:$0xf]
      %v486 = vld [vmem:[%s473 + $0x30] sm:$0xf]
      %v487 = vld [vmem:[%s473 + $0x34] sm:$0xf]
      %v488 = vld [vmem:[%s473 + $0x38] sm:$0xf]
      %v489 = vld [vmem:[%s473 + $0x3c] sm:$0xf]
      %v490 = vld [vmem:[%s473 + $0x40] sm:$0xf]
      %v491 = vld [vmem:[%s473 + $0x44] sm:$0xf]
      %v492 = vld [vmem:[%s473 + $0x48] sm:$0xf]
      %v493 = vld [vmem:[%s473 + $0x4c] sm:$0xf]
      %v494 = vld [vmem:[%s473 + $0x50] sm:$0xf]
      %v495 = vld [vmem:[%s473 + $0x54] sm:$0xf]
      %v496 = vld [vmem:[%s473 + $0x58] sm:$0xf]
      %v497 = vld [vmem:[%s473 + $0x5c] sm:$0xf]
      %v498 = vld [vmem:[%s473 + $0x60] sm:$0x3]
      %v524 = vunpack.c.l.b16 %v474
      %v525 = vunpack.c.l.b16 %v475
      %v526 = vunpack.c.l.b16 %v476
      %v527 = vunpack.c.l.b16 %v477
      %v528 = vunpack.c.l.b16 %v478
      %v529 = vunpack.c.l.b16 %v479
      %v530 = vunpack.c.l.b16 %v480
      %v531 = vunpack.c.l.b16 %v481
      %v532 = vunpack.c.l.b16 %v482
      %v533 = vunpack.c.l.b16 %v483
      %v534 = vunpack.c.l.b16 %v484
      %v535 = vunpack.c.l.b16 %v485
      %v536 = vunpack.c.l.b16 %v486
      %v537 = vunpack.c.l.b16 %v487
      %v538 = vunpack.c.l.b16 %v488
      %v539 = vunpack.c.l.b16 %v489
      %v540 = vunpack.c.l.b16 %v490
      %v541 = vunpack.c.l.b16 %v491
      %v542 = vunpack.c.l.b16 %v492
      %v543 = vunpack.c.l.b16 %v493
      %v544 = vunpack.c.l.b16 %v494
      %v545 = vunpack.c.l.b16 %v495
      %v546 = vunpack.c.l.b16 %v496
      %v547 = vunpack.c.l.b16 %v497
      %v548 = vunpack.c.l.b16 %v498
      %v549 = vpack.c.b16 %v525, %v524
      %v550 = vpack.c.b16 %v527, %v526
      %v551 = vpack.c.b16 %v529, %v528
      %v552 = vpack.c.b16 %v531, %v530
      %v553 = vpack.c.b16 %v533, %v532
      %v554 = vpack.c.b16 %v535, %v534
      %v555 = vpack.c.b16 %v537, %v536
      %v556 = vpack.c.b16 %v539, %v538
      %v557 = vpack.c.b16 %v541, %v540
      %v558 = vpack.c.b16 %v543, %v542
      %v559 = vpack.c.b16 %v545, %v544
      %v560 = vpack.c.b16 %v547, %v546
      %v561 = vpack.c.b16 %v548, %v548
      %575 = vmatprep.subr.bf16.mxu0 0
      %576 = vmatpush1.bf16.msra.mxu0 %v321
      %577 = vmatprep.subr.bf16.mxu0 0
      %578 = vmatpush1.bf16.msra.mxu0 %v322
      %579 = vmatprep.subr.bf16.mxu0 0
      %580 = vmatpush1.bf16.msra.mxu0 %v323
      %581 = vmatprep.subr.bf16.mxu0 0
      %582 = vmatpush1.bf16.msra.mxu0 %v324
      %583 = vmatprep.subr.bf16.mxu0 0
      %584 = vmatpush1.bf16.msra.mxu0 %v325
      %585 = vmatprep.subr.bf16.mxu0 0
      %586 = vmatpush1.bf16.msra.mxu0 %v326
      %587 = vmatprep.subr.bf16.mxu0 0
      %588 = vmatpush1.bf16.msra.mxu0 %v327
      %589 = vmatprep.subr.bf16.mxu0 0
      %590 = vmatpush1.bf16.msra.mxu0 %v328
      %591 = vmatprep.subr.bf16.mxu0 0
      %592 = vmatpush1.bf16.msra.mxu0 0
      %593 = vmatprep.subr.bf16.mxu0 0
      %594 = vmatpush1.bf16.msra.mxu0 0
      %595 = vmatprep.subr.bf16.mxu0 0
      %596 = vmatpush1.bf16.msra.mxu0 0
      %597 = vmatprep.subr.bf16.mxu0 0
      %598 = vmatpush1.bf16.msra.mxu0 0
      %599 = vmatprep.subr.bf16.mxu0 0
      %600 = vmatpush1.bf16.msra.mxu0 0
      %601 = vmatprep.subr.bf16.mxu0 0
      %602 = vmatpush1.bf16.msra.mxu0 0
      %603 = vmatprep.subr.bf16.mxu0 0
      %604 = vmatpush1.bf16.msra.mxu0 0
      %605 = vmatprep.subr.bf16.mxu0 0
      %606 = vmatpush1.bf16.msra.mxu0 0
      %607 = vmatprep.mubr.bf16.mxu0 0
      %608 = vmatmul.mubr.bf16.gmra.mrb[0].mxu0 %v549
      %v609 = vpop.f32.mrb[0].mxu0
      %v610 = vadd.f32 0.0, %v609
      %v611 = vpop.f32.mrb[0].mxu0
      %v612 = vpop.f32.mrb[0].mxu0
      %v613 = vadd.f32 0.0, %v612
      %v614 = vpop.f32.mrb[0].mxu0
      %615 = vmatprep.mubr.bf16.mxu0 0
      %616 = vmatmul.mubr.bf16.gmra.mrb[0].mxu0 %v550
      %v617 = vpop.f32.mrb[0].mxu0
      %v618 = vadd.f32 0.0, %v617
      %v619 = vpop.f32.mrb[0].mxu0
      %v620 = vpop.f32.mrb[0].mxu0
      %v621 = vadd.f32 0.0, %v620
      %v622 = vpop.f32.mrb[0].mxu0
      %623 = vmatprep.mubr.bf16.mxu0 0
      %624 = vmatmul.mubr.bf16.gmra.mrb[0].mxu0 %v551
      %v625 = vpop.f32.mrb[0].mxu0
      %v626 = vadd.f32 0.0, %v625
      %v627 = vpop.f32.mrb[0].mxu0
      %v628 = vpop.f32.mrb[0].mxu0
      %v629 = vadd.f32 0.0, %v628
      %v630 = vpop.f32.mrb[0].mxu0
      %631 = vmatprep.mubr.bf16.mxu0 0
      %632 = vmatmul.mubr.bf16.gmra.mrb[0].mxu0 %v552
      %v633 = vpop.f32.mrb[0].mxu0
      %v634 = vadd.f32 0.0, %v633
      %v635 = vpop.f32.mrb[0].mxu0
      %v636 = vpop.f32.mrb[0].mxu0
      %v637 = vadd.f32 0.0, %v636
      %v638 = vpop.f32.mrb[0].mxu0
      %639 = vmatprep.mubr.bf16.mxu0 0
      %640 = vmatmul.mubr.bf16.gmra.mrb[0].mxu0 %v553
      %v641 = vpop.f32.mrb[0].mxu0
      %v642 = vadd.f32 0.0, %v641
      %v643 = vpop.f32.mrb[0].mxu0
      %v644 = vpop.f32.mrb[0].mxu0
      %v645 = vadd.f32 0.0, %v644
      %v646 = vpop.f32.mrb[0].mxu0
      %647 = vmatprep.mubr.bf16.mxu0 0
      %648 = vmatmul.mubr.bf16.gmra.mrb[0].mxu0 %v554
      %v649 = vpop.f32.mrb[0].mxu0
      %v650 = vadd.f32 0.0, %v649
      %v651 = vpop.f32.mrb[0].mxu0
      %v652 = vpop.f32.mrb[0].mxu0
      %v653 = vadd.f32 0.0, %v652
      %v654 = vpop.f32.mrb[0].mxu0
      %655 = vmatprep.mubr.bf16.mxu0 0
      %656 = vmatmul.mubr.bf16.gmra.mrb[0].mxu0 %v555
      %v657 = vpop.f32.mrb[0].mxu0
      %v658 = vadd.f32 0.0, %v657
      %v659 = vpop.f32.mrb[0].mxu0
      %v660 = vpop.f32.mrb[0].mxu0
      %v661 = vadd.f32 0.0, %v660
      %v662 = vpop.f32.mrb[0].mxu0
      %663 = vmatprep.mubr.bf16.mxu0 0
      %664 = vmatmul.mubr.bf16.gmra.mrb[0].mxu0 %v556
      %v665 = vpop.f32.mrb[0].mxu0
      %v666 = vadd.f32 0.0, %v665
      %v667 = vpop.f32.mrb[0].mxu0
      %v668 = vpop.f32.mrb[0].mxu0
      %v669 = vadd.f32 0.0, %v668
      %v670 = vpop.f32.mrb[0].mxu0
      %671 = vmatprep.mubr.bf16.mxu0 0
      %672 = vmatmul.mubr.bf16.gmra.mrb[0].mxu0 %v557
      %v673 = vpop.f32.mrb[0].mxu0
      %v674 = vadd.f32 0.0, %v673
      %v675 = vpop.f32.mrb[0].mxu0
      %v676 = vpop.f32.mrb[0].mxu0
      %v677 = vadd.f32 0.0, %v676
      %v678 = vpop.f32.mrb[0].mxu0
      %679 = vmatprep.mubr.bf16.mxu0 0
      %680 = vmatmul.mubr.bf16.gmra.mrb[0].mxu0 %v558
      %v681 = vpop.f32.mrb[0].mxu0
      %v682 = vadd.f32 0.0, %v681
      %v683 = vpop.f32.mrb[0].mxu0
      %v684 = vpop.f32.mrb[0].mxu0
      %v685 = vadd.f32 0.0, %v684
      %v686 = vpop.f32.mrb[0].mxu0
      %687 = vmatprep.mubr.bf16.mxu0 0
      %688 = vmatmul.mubr.bf16.gmra.mrb[0].mxu0 %v559
      %v689 = vpop.f32.mrb[0].mxu0
      %v690 = vadd.f32 0.0, %v689
      %v691 = vpop.f32.mrb[0].mxu0
      %v692 = vpop.f32.mrb[0].mxu0
      %v693 = vadd.f32 0.0, %v692
      %v694 = vpop.f32.mrb[0].mxu0
      %695 = vmatprep.mubr.bf16.mxu0 0
      %696 = vmatmul.mubr.bf16.gmra.mrb[0].mxu0 %v560
      %v697 = vpop.f32.mrb[0].mxu0
      %v698 = vadd.f32 0.0, %v697
      %v699 = vpop.f32.mrb[0].mxu0
      %v700 = vpop.f32.mrb[0].mxu0
      %v701 = vadd.f32 0.0, %v700
      %v702 = vpop.f32.mrb[0].mxu0
      %703 = vmatprep.mubr.bf16.mxu0 0
      %704 = vmatmul.mubr.bf16.gmra.mrb[0].mxu0 %v561
      %v705 = vpop.f32.mrb[0].mxu0
      %v706 = vadd.f32 0.0, %v705
      %v707 = vpop.f32.mrb[0].mxu0
      %v708 = vpop.f32.mrb[0].mxu0
      %v709 = vpop.f32.mrb[0].mxu0
      %710 = vdwg.mxu0
      %v711 = vmax.f32 %v372, %v610
      %v712 = vmax.f32 %v375, %v613
      %v713 = vmax.f32 %v380, %v618
      %v714 = vmax.f32 %v383, %v621
      %v715 = vmax.f32 %v388, %v626
      %v716 = vmax.f32 %v391, %v629
      %v717 = vmax.f32 %v396, %v634
      %v718 = vmax.f32 %v399, %v637
      %v719 = vmax.f32 %v404, %v642
      %v720 = vmax.f32 %v407, %v645
      %v721 = vmax.f32 %v412, %v650
      %v722 = vmax.f32 %v415, %v653
      %v723 = vmax.f32 %v420, %v658
      %v724 = vmax.f32 %v423, %v661
      %v725 = vmax.f32 %v428, %v666
      %v726 = vmax.f32 %v431, %v669
      %v727 = vmax.f32 %v436, %v674
      %v728 = vmax.f32 %v439, %v677
      %v729 = vmax.f32 %v444, %v682
      %v730 = vmax.f32 %v447, %v685
      %v731 = vmax.f32 %v452, %v690
      %v732 = vmax.f32 %v455, %v693
      %v733 = vmax.f32 %v460, %v698
      %v734 = vmax.f32 %v463, %v701
      %v735 = vmax.f32 %v468, %v706
      %s736 = scalar_lea.vmem %s165, 200
      %v737 = vld [vmem:[%s736] sm:$0xf]
      %v738 = vld [vmem:[%s736 + $0x4] sm:$0xf]
      %v739 = vld [vmem:[%s736 + $0x8] sm:$0xf]
      %v740 = vld [vmem:[%s736 + $0xc] sm:$0xf]
      %v741 = vld [vmem:[%s736 + $0x10] sm:$0xf]
      %v742 = vld [vmem:[%s736 + $0x14] sm:$0xf]
      %v743 = vld [vmem:[%s736 + $0x18] sm:$0xf]
      %v744 = vld [vmem:[%s736 + $0x1c] sm:$0xf]
      %v745 = vld [vmem:[%s736 + $0x20] sm:$0xf]
      %v746 = vld [vmem:[%s736 + $0x24] sm:$0xf]
      %v747 = vld [vmem:[%s736 + $0x28] sm:$0xf]
      %v748 = vld [vmem:[%s736 + $0x2c] sm:$0xf]
      %v749 = vld [vmem:[%s736 + $0x30] sm:$0xf]
      %v750 = vld [vmem:[%s736 + $0x34] sm:$0xf]
      %v751 = vld [vmem:[%s736 + $0x38] sm:$0xf]
      %v752 = vld [vmem:[%s736 + $0x3c] sm:$0xf]
      %v753 = vld [vmem:[%s736 + $0x40] sm:$0xf]
      %v754 = vld [vmem:[%s736 + $0x44] sm:$0xf]
      %v755 = vld [vmem:[%s736 + $0x48] sm:$0xf]
      %v756 = vld [vmem:[%s736 + $0x4c] sm:$0xf]
      %v757 = vld [vmem:[%s736 + $0x50] sm:$0xf]
      %v758 = vld [vmem:[%s736 + $0x54] sm:$0xf]
      %v759 = vld [vmem:[%s736 + $0x58] sm:$0xf]
      %v760 = vld [vmem:[%s736 + $0x5c] sm:$0xf]
      %v761 = vld [vmem:[%s736 + $0x60] sm:$0x3]
      %v787 = vunpack.c.l.b16 %v737
      %v788 = vunpack.c.l.b16 %v738
      %v789 = vunpack.c.l.b16 %v739
      %v790 = vunpack.c.l.b16 %v740
      %v791 = vunpack.c.l.b16 %v741
      %v792 = vunpack.c.l.b16 %v742
      %v793 = vunpack.c.l.b16 %v743
      %v794 = vunpack.c.l.b16 %v744
      %v795 = vunpack.c.l.b16 %v745
      %v796 = vunpack.c.l.b16 %v746
      %v797 = vunpack.c.l.b16 %v747
      %v798 = vunpack.c.l.b16 %v748
      %v799 = vunpack.c.l.b16 %v749
      %v800 = vunpack.c.l.b16 %v750
      %v801 = vunpack.c.l.b16 %v751
      %v802 = vunpack.c.l.b16 %v752
      %v803 = vunpack.c.l.b16 %v753
      %v804 = vunpack.c.l.b16 %v754
      %v805 = vunpack.c.l.b16 %v755
      %v806 = vunpack.c.l.b16 %v756
      %v807 = vunpack.c.l.b16 %v757
      %v808 = vunpack.c.l.b16 %v758
      %v809 = vunpack.c.l.b16 %v759
      %v810 = vunpack.c.l.b16 %v760
      %v811 = vunpack.c.l.b16 %v761
      %v812 = vpack.c.b16 %v788, %v787
      %v813 = vpack.c.b16 %v790, %v789
      %v814 = vpack.c.b16 %v792, %v791
      %v815 = vpack.c.b16 %v794, %v793
      %v816 = vpack.c.b16 %v796, %v795
      %v817 = vpack.c.b16 %v798, %v797
      %v818 = vpack.c.b16 %v800, %v799
      %v819 = vpack.c.b16 %v802, %v801
      %v820 = vpack.c.b16 %v804, %v803
      %v821 = vpack.c.b16 %v806, %v805
      %v822 = vpack.c.b16 %v808, %v807
      %v823 = vpack.c.b16 %v810, %v809
      %v824 = vpack.c.b16 %v811, %v811
      %838 = vmatprep.subr.bf16.mxu0 0
      %839 = vmatpush1.bf16.msra.mxu0 %v321
      %840 = vmatprep.subr.bf16.mxu0 0
      %841 = vmatpush1.bf16.msra.mxu0 %v322
      %842 = vmatprep.subr.bf16.mxu0 0
      %843 = vmatpush1.bf16.msra.mxu0 %v323
      %844 = vmatprep.subr.bf16.mxu0 0
      %845 = vmatpush1.bf16.msra.mxu0 %v324
      %846 = vmatprep.subr.bf16.mxu0 0
      %847 = vmatpush1.bf16.msra.mxu0 %v325
      %848 = vmatprep.subr.bf16.mxu0 0
      %849 = vmatpush1.bf16.msra.mxu0 %v326
      %850 = vmatprep.subr.bf16.mxu0 0
      %851 = vmatpush1.bf16.msra.mxu0 %v327
      %852 = vmatprep.subr.bf16.mxu0 0
      %853 = vmatpush1.bf16.msra.mxu0 %v328
      %854 = vmatprep.subr.bf16.mxu0 0
      %855 = vmatpush1.bf16.msra.mxu0 0
      %856 = vmatprep.subr.bf16.mxu0 0
      %857 = vmatpush1.bf16.msra.mxu0 0
      %858 = vmatprep.subr.bf16.mxu0 0
      %859 = vmatpush1.bf16.msra.mxu0 0
      %860 = vmatprep.subr.bf16.mxu0 0
      %861 = vmatpush1.bf16.msra.mxu0 0
      %862 = vmatprep.subr.bf16.mxu0 0
      %863 = vmatpush1.bf16.msra.mxu0 0
      %864 = vmatprep.subr.bf16.mxu0 0
      %865 = vmatpush1.bf16.msra.mxu0 0
      %866 = vmatprep.subr.bf16.mxu0 0
      %867 = vmatpush1.bf16.msra.mxu0 0
      %868 = vmatprep.subr.bf16.mxu0 0
      %869 = vmatpush1.bf16.msra.mxu0 0
      %870 = vmatprep.mubr.bf16.mxu0 0
      %871 = vmatmul.mubr.bf16.gmra.mrb[0].mxu0 %v812
      %v872 = vpop.f32.mrb[0].mxu0
      %v873 = vadd.f32 0.0, %v872
      %v874 = vpop.f32.mrb[0].mxu0
      %v875 = vpop.f32.mrb[0].mxu0
      %v876 = vadd.f32 0.0, %v875
      %v877 = vpop.f32.mrb[0].mxu0
      %878 = vmatprep.mubr.bf16.mxu0 0
      %879 = vmatmul.mubr.bf16.gmra.mrb[0].mxu0 %v813
      %v880 = vpop.f32.mrb[0].mxu0
      %v881 = vadd.f32 0.0, %v880
      %v882 = vpop.f32.mrb[0].mxu0
      %v883 = vpop.f32.mrb[0].mxu0
      %v884 = vadd.f32 0.0, %v883
      %v885 = vpop.f32.mrb[0].mxu0
      %886 = vmatprep.mubr.bf16.mxu0 0
      %887 = vmatmul.mubr.bf16.gmra.mrb[0].mxu0 %v814
      %v888 = vpop.f32.mrb[0].mxu0
      %v889 = vadd.f32 0.0, %v888
      %v890 = vpop.f32.mrb[0].mxu0
      %v891 = vpop.f32.mrb[0].mxu0
      %v892 = vadd.f32 0.0, %v891
      %v893 = vpop.f32.mrb[0].mxu0
      %894 = vmatprep.mubr.bf16.mxu0 0
      %895 = vmatmul.mubr.bf16.gmra.mrb[0].mxu0 %v815
      %v896 = vpop.f32.mrb[0].mxu0
      %v897 = vadd.f32 0.0, %v896
      %v898 = vpop.f32.mrb[0].mxu0
      %v899 = vpop.f32.mrb[0].mxu0
      %v900 = vadd.f32 0.0, %v899
      %v901 = vpop.f32.mrb[0].mxu0
      %902 = vmatprep.mubr.bf16.mxu0 0
      %903 = vmatmul.mubr.bf16.gmra.mrb[0].mxu0 %v816
      %v904 = vpop.f32.mrb[0].mxu0
      %v905 = vadd.f32 0.0, %v904
      %v906 = vpop.f32.mrb[0].mxu0
      %v907 = vpop.f32.mrb[0].mxu0
      %v908 = vadd.f32 0.0, %v907
      %v909 = vpop.f32.mrb[0].mxu0
      %910 = vmatprep.mubr.bf16.mxu0 0
      %911 = vmatmul.mubr.bf16.gmra.mrb[0].mxu0 %v817
      %v912 = vpop.f32.mrb[0].mxu0
      %v913 = vadd.f32 0.0, %v912
      %v914 = vpop.f32.mrb[0].mxu0
      %v915 = vpop.f32.mrb[0].mxu0
      %v916 = vadd.f32 0.0, %v915
      %v917 = vpop.f32.mrb[0].mxu0
      %918 = vmatprep.mubr.bf16.mxu0 0
      %919 = vmatmul.mubr.bf16.gmra.mrb[0].mxu0 %v818
      %v920 = vpop.f32.mrb[0].mxu0
      %v921 = vadd.f32 0.0, %v920
      %v922 = vpop.f32.mrb[0].mxu0
      %v923 = vpop.f32.mrb[0].mxu0
      %v924 = vadd.f32 0.0, %v923
      %v925 = vpop.f32.mrb[0].mxu0
      %926 = vmatprep.mubr.bf16.mxu0 0
      %927 = vmatmul.mubr.bf16.gmra.mrb[0].mxu0 %v819
      %v928 = vpop.f32.mrb[0].mxu0
      %v929 = vadd.f32 0.0, %v928
      %v930 = vpop.f32.mrb[0].mxu0
      %v931 = vpop.f32.mrb[0].mxu0
      %v932 = vadd.f32 0.0, %v931
      %v933 = vpop.f32.mrb[0].mxu0
      %934 = vmatprep.mubr.bf16.mxu0 0
      %935 = vmatmul.mubr.bf16.gmra.mrb[0].mxu0 %v820
      %v936 = vpop.f32.mrb[0].mxu0
      %v937 = vadd.f32 0.0, %v936
      %v938 = vpop.f32.mrb[0].mxu0
      %v939 = vpop.f32.mrb[0].mxu0
      %v940 = vadd.f32 0.0, %v939
      %v941 = vpop.f32.mrb[0].mxu0
      %942 = vmatprep.mubr.bf16.mxu0 0
      %943 = vmatmul.mubr.bf16.gmra.mrb[0].mxu0 %v821
      %v944 = vpop.f32.mrb[0].mxu0
      %v945 = vadd.f32 0.0, %v944
      %v946 = vpop.f32.mrb[0].mxu0
      %v947 = vpop.f32.mrb[0].mxu0
      %v948 = vadd.f32 0.0, %v947
      %v949 = vpop.f32.mrb[0].mxu0
      %950 = vmatprep.mubr.bf16.mxu0 0
      %951 = vmatmul.mubr.bf16.gmra.mrb[0].mxu0 %v822
      %v952 = vpop.f32.mrb[0].mxu0
      %v953 = vadd.f32 0.0, %v952
      %v954 = vpop.f32.mrb[0].mxu0
      %v955 = vpop.f32.mrb[0].mxu0
      %v956 = vadd.f32 0.0, %v955
      %v957 = vpop.f32.mrb[0].mxu0
      %958 = vmatprep.mubr.bf16.mxu0 0
      %959 = vmatmul.mubr.bf16.gmra.mrb[0].mxu0 %v823
      %v960 = vpop.f32.mrb[0].mxu0
      %v961 = vadd.f32 0.0, %v960
      %v962 = vpop.f32.mrb[0].mxu0
      %v963 = vpop.f32.mrb[0].mxu0
      %v964 = vadd.f32 0.0, %v963
      %v965 = vpop.f32.mrb[0].mxu0
      %966 = vmatprep.mubr.bf16.mxu0 0
      %967 = vmatmul.mubr.bf16.gmra.mrb[0].mxu0 %v824
      %v968 = vpop.f32.mrb[0].mxu0
      %v969 = vadd.f32 0.0, %v968
      %v970 = vpop.f32.mrb[0].mxu0
      %v971 = vpop.f32.mrb[0].mxu0
      %v972 = vpop.f32.mrb[0].mxu0
      %973 = vdwg.mxu0
      %v974 = vmax.f32 %v711, %v873
      %v975 = vmax.f32 %v712, %v876
      %v976 = vmax.f32 %v713, %v881
      %v977 = vmax.f32 %v714, %v884
      %v978 = vmax.f32 %v715, %v889
      %v979 = vmax.f32 %v716, %v892
      %v980 = vmax.f32 %v717, %v897
      %v981 = vmax.f32 %v718, %v900
      %v982 = vmax.f32 %v719, %v905
      %v983 = vmax.f32 %v720, %v908
      %v984 = vmax.f32 %v721, %v913
      %v985 = vmax.f32 %v722, %v916
      %v986 = vmax.f32 %v723, %v921
      %v987 = vmax.f32 %v724, %v924
      %v988 = vmax.f32 %v725, %v929
      %v989 = vmax.f32 %v726, %v932
      %v990 = vmax.f32 %v727, %v937
      %v991 = vmax.f32 %v728, %v940
      %v992 = vmax.f32 %v729, %v945
      %v993 = vmax.f32 %v730, %v948
      %v994 = vmax.f32 %v731, %v953
      %v995 = vmax.f32 %v732, %v956
      %v996 = vmax.f32 %v733, %v961
      %v997 = vmax.f32 %v734, %v964
      %v998 = vmax.f32 %v735, %v969
      %s999 = scalar_lea.vmem %s165, 300
      %v1000 = vld [vmem:[%s999] sm:$0xf]
      %v1001 = vld [vmem:[%s999 + $0x4] sm:$0xf]
      %v1002 = vld [vmem:[%s999 + $0x8] sm:$0xf]
      %v1003 = vld [vmem:[%s999 + $0xc] sm:$0xf]
      %v1004 = vld [vmem:[%s999 + $0x10] sm:$0xf]
      %v1005 = vld [vmem:[%s999 + $0x14] sm:$0xf]
      %v1006 = vld [vmem:[%s999 + $0x18] sm:$0xf]
      %v1007 = vld [vmem:[%s999 + $0x1c] sm:$0xf]
      %v1008 = vld [vmem:[%s999 + $0x20] sm:$0xf]
      %v1009 = vld [vmem:[%s999 + $0x24] sm:$0xf]
      %v1010 = vld [vmem:[%s999 + $0x28] sm:$0xf]
      %v1011 = vld [vmem:[%s999 + $0x2c] sm:$0xf]
      %v1012 = vld [vmem:[%s999 + $0x30] sm:$0xf]
      %v1013 = vld [vmem:[%s999 + $0x34] sm:$0xf]
      %v1014 = vld [vmem:[%s999 + $0x38] sm:$0xf]
      %v1015 = vld [vmem:[%s999 + $0x3c] sm:$0xf]
      %v1016 = vld [vmem:[%s999 + $0x40] sm:$0xf]
      %v1017 = vld [vmem:[%s999 + $0x44] sm:$0xf]
      %v1018 = vld [vmem:[%s999 + $0x48] sm:$0xf]
      %v1019 = vld [vmem:[%s999 + $0x4c] sm:$0xf]
      %v1020 = vld [vmem:[%s999 + $0x50] sm:$0xf]
      %v1021 = vld [vmem:[%s999 + $0x54] sm:$0xf]
      %v1022 = vld [vmem:[%s999 + $0x58] sm:$0xf]
      %v1023 = vld [vmem:[%s999 + $0x5c] sm:$0xf]
      %v1024 = vld [vmem:[%s999 + $0x60] sm:$0x3]
      %v1050 = vunpack.c.l.b16 %v1000
      %v1051 = vunpack.c.l.b16 %v1001
      %v1052 = vunpack.c.l.b16 %v1002
      %v1053 = vunpack.c.l.b16 %v1003
      %v1054 = vunpack.c.l.b16 %v1004
      %v1055 = vunpack.c.l.b16 %v1005
      %v1056 = vunpack.c.l.b16 %v1006
      %v1057 = vunpack.c.l.b16 %v1007
      %v1058 = vunpack.c.l.b16 %v1008
      %v1059 = vunpack.c.l.b16 %v1009
      %v1060 = vunpack.c.l.b16 %v1010
      %v1061 = vunpack.c.l.b16 %v1011
      %v1062 = vunpack.c.l.b16 %v1012
      %v1063 = vunpack.c.l.b16 %v1013
      %v1064 = vunpack.c.l.b16 %v1014
      %v1065 = vunpack.c.l.b16 %v1015
      %v1066 = vunpack.c.l.b16 %v1016
      %v1067 = vunpack.c.l.b16 %v1017
      %v1068 = vunpack.c.l.b16 %v1018
      %v1069 = vunpack.c.l.b16 %v1019
      %v1070 = vunpack.c.l.b16 %v1020
      %v1071 = vunpack.c.l.b16 %v1021
      %v1072 = vunpack.c.l.b16 %v1022
      %v1073 = vunpack.c.l.b16 %v1023
      %v1074 = vunpack.c.l.b16 %v1024
      %v1075 = vpack.c.b16 %v1051, %v1050
      %v1076 = vpack.c.b16 %v1053, %v1052
      %v1077 = vpack.c.b16 %v1055, %v1054
      %v1078 = vpack.c.b16 %v1057, %v1056
      %v1079 = vpack.c.b16 %v1059, %v1058
      %v1080 = vpack.c.b16 %v1061, %v1060
      %v1081 = vpack.c.b16 %v1063, %v1062
      %v1082 = vpack.c.b16 %v1065, %v1064
      %v1083 = vpack.c.b16 %v1067, %v1066
      %v1084 = vpack.c.b16 %v1069, %v1068
      %v1085 = vpack.c.b16 %v1071, %v1070
      %v1086 = vpack.c.b16 %v1073, %v1072
      %v1087 = vpack.c.b16 %v1074, %v1074
      %1101 = vmatprep.subr.bf16.mxu0 0
      %1102 = vmatpush1.bf16.msra.mxu0 %v321
      %1103 = vmatprep.subr.bf16.mxu0 0
      %1104 = vmatpush1.bf16.msra.mxu0 %v322
      %1105 = vmatprep.subr.bf16.mxu0 0
      %1106 = vmatpush1.bf16.msra.mxu0 %v323
      %1107 = vmatprep.subr.bf16.mxu0 0
      %1108 = vmatpush1.bf16.msra.mxu0 %v324
      %1109 = vmatprep.subr.bf16.mxu0 0
      %1110 = vmatpush1.bf16.msra.mxu0 %v325
      %1111 = vmatprep.subr.bf16.mxu0 0
      %1112 = vmatpush1.bf16.msra.mxu0 %v326
      %1113 = vmatprep.subr.bf16.mxu0 0
      %1114 = vmatpush1.bf16.msra.mxu0 %v327
      %1115 = vmatprep.subr.bf16.mxu0 0
      %1116 = vmatpush1.bf16.msra.mxu0 %v328
      %1117 = vmatprep.subr.bf16.mxu0 0
      %1118 = vmatpush1.bf16.msra.mxu0 0
      %1119 = vmatprep.subr.bf16.mxu0 0
      %1120 = vmatpush1.bf16.msra.mxu0 0
      %1121 = vmatprep.subr.bf16.mxu0 0
      %1122 = vmatpush1.bf16.msra.mxu0 0
      %1123 = vmatprep.subr.bf16.mxu0 0
      %1124 = vmatpush1.bf16.msra.mxu0 0
      %1125 = vmatprep.subr.bf16.mxu0 0
      %1126 = vmatpush1.bf16.msra.mxu0 0
      %1127 = vmatprep.subr.bf16.mxu0 0
      %1128 = vmatpush1.bf16.msra.mxu0 0
      %1129 = vmatprep.subr.bf16.mxu0 0
      %1130 = vmatpush1.bf16.msra.mxu0 0
      %1131 = vmatprep.subr.bf16.mxu0 0
      %1132 = vmatpush1.bf16.msra.mxu0 0
      %1133 = vmatprep.mubr.bf16.mxu0 0
      %1134 = vmatmul.mubr.bf16.gmra.mrb[0].mxu0 %v1075
      %v1135 = vpop.f32.mrb[0].mxu0
      %v1136 = vadd.f32 0.0, %v1135
      %v1137 = vpop.f32.mrb[0].mxu0
      %v1138 = vpop.f32.mrb[0].mxu0
      %v1139 = vadd.f32 0.0, %v1138
      %v1140 = vpop.f32.mrb[0].mxu0
      %1141 = vmatprep.mubr.bf16.mxu0 0
      %1142 = vmatmul.mubr.bf16.gmra.mrb[0].mxu0 %v1076
      %v1143 = vpop.f32.mrb[0].mxu0
      %v1144 = vadd.f32 0.0, %v1143
      %v1145 = vpop.f32.mrb[0].mxu0
      %v1146 = vpop.f32.mrb[0].mxu0
      %v1147 = vadd.f32 0.0, %v1146
      %v1148 = vpop.f32.mrb[0].mxu0
      %1149 = vmatprep.mubr.bf16.mxu0 0
      %1150 = vmatmul.mubr.bf16.gmra.mrb[0].mxu0 %v1077
      %v1151 = vpop.f32.mrb[0].mxu0
      %v1152 = vadd.f32 0.0, %v1151
      %v1153 = vpop.f32.mrb[0].mxu0
      %v1154 = vpop.f32.mrb[0].mxu0
      %v1155 = vadd.f32 0.0, %v1154
      %v1156 = vpop.f32.mrb[0].mxu0
      %1157 = vmatprep.mubr.bf16.mxu0 0
      %1158 = vmatmul.mubr.bf16.gmra.mrb[0].mxu0 %v1078
      %v1159 = vpop.f32.mrb[0].mxu0
      %v1160 = vadd.f32 0.0, %v1159
      %v1161 = vpop.f32.mrb[0].mxu0
      %v1162 = vpop.f32.mrb[0].mxu0
      %v1163 = vadd.f32 0.0, %v1162
      %v1164 = vpop.f32.mrb[0].mxu0
      %1165 = vmatprep.mubr.bf16.mxu0 0
      %1166 = vmatmul.mubr.bf16.gmra.mrb[0].mxu0 %v1079
      %v1167 = vpop.f32.mrb[0].mxu0
      %v1168 = vadd.f32 0.0, %v1167
      %v1169 = vpop.f32.mrb[0].mxu0
      %v1170 = vpop.f32.mrb[0].mxu0
      %v1171 = vadd.f32 0.0, %v1170
      %v1172 = vpop.f32.mrb[0].mxu0
      %1173 = vmatprep.mubr.bf16.mxu0 0
      %1174 = vmatmul.mubr.bf16.gmra.mrb[0].mxu0 %v1080
      %v1175 = vpop.f32.mrb[0].mxu0
      %v1176 = vadd.f32 0.0, %v1175
      %v1177 = vpop.f32.mrb[0].mxu0
      %v1178 = vpop.f32.mrb[0].mxu0
      %v1179 = vadd.f32 0.0, %v1178
      %v1180 = vpop.f32.mrb[0].mxu0
      %1181 = vmatprep.mubr.bf16.mxu0 0
      %1182 = vmatmul.mubr.bf16.gmra.mrb[0].mxu0 %v1081
      %v1183 = vpop.f32.mrb[0].mxu0
      %v1184 = vadd.f32 0.0, %v1183
      %v1185 = vpop.f32.mrb[0].mxu0
      %v1186 = vpop.f32.mrb[0].mxu0
      %v1187 = vadd.f32 0.0, %v1186
      %v1188 = vpop.f32.mrb[0].mxu0
      %1189 = vmatprep.mubr.bf16.mxu0 0
      %1190 = vmatmul.mubr.bf16.gmra.mrb[0].mxu0 %v1082
      %v1191 = vpop.f32.mrb[0].mxu0
      %v1192 = vadd.f32 0.0, %v1191
      %v1193 = vpop.f32.mrb[0].mxu0
      %v1194 = vpop.f32.mrb[0].mxu0
      %v1195 = vadd.f32 0.0, %v1194
      %v1196 = vpop.f32.mrb[0].mxu0
      %1197 = vmatprep.mubr.bf16.mxu0 0
      %1198 = vmatmul.mubr.bf16.gmra.mrb[0].mxu0 %v1083
      %v1199 = vpop.f32.mrb[0].mxu0
      %v1200 = vadd.f32 0.0, %v1199
      %v1201 = vpop.f32.mrb[0].mxu0
      %v1202 = vpop.f32.mrb[0].mxu0
      %v1203 = vadd.f32 0.0, %v1202
      %v1204 = vpop.f32.mrb[0].mxu0
      %1205 = vmatprep.mubr.bf16.mxu0 0
      %1206 = vmatmul.mubr.bf16.gmra.mrb[0].mxu0 %v1084
      %v1207 = vpop.f32.mrb[0].mxu0
      %v1208 = vadd.f32 0.0, %v1207
      %v1209 = vpop.f32.mrb[0].mxu0
      %v1210 = vpop.f32.mrb[0].mxu0
      %v1211 = vadd.f32 0.0, %v1210
      %v1212 = vpop.f32.mrb[0].mxu0
      %1213 = vmatprep.mubr.bf16.mxu0 0
      %1214 = vmatmul.mubr.bf16.gmra.mrb[0].mxu0 %v1085
      %v1215 = vpop.f32.mrb[0].mxu0
      %v1216 = vadd.f32 0.0, %v1215
      %v1217 = vpop.f32.mrb[0].mxu0
      %v1218 = vpop.f32.mrb[0].mxu0
      %v1219 = vadd.f32 0.0, %v1218
      %v1220 = vpop.f32.mrb[0].mxu0
      %1221 = vmatprep.mubr.bf16.mxu0 0
      %1222 = vmatmul.mubr.bf16.gmra.mrb[0].mxu0 %v1086
      %v1223 = vpop.f32.mrb[0].mxu0
      %v1224 = vadd.f32 0.0, %v1223
      %v1225 = vpop.f32.mrb[0].mxu0
      %v1226 = vpop.f32.mrb[0].mxu0
      %v1227 = vadd.f32 0.0, %v1226
      %v1228 = vpop.f32.mrb[0].mxu0
      %1229 = vmatprep.mubr.bf16.mxu0 0
      %1230 = vmatmul.mubr.bf16.gmra.mrb[0].mxu0 %v1087
      %v1231 = vpop.f32.mrb[0].mxu0
      %v1232 = vadd.f32 0.0, %v1231
      %v1233 = vpop.f32.mrb[0].mxu0
      %v1234 = vpop.f32.mrb[0].mxu0
      %v1235 = vpop.f32.mrb[0].mxu0
      %1236 = vdwg.mxu0
      %v1237 = vmax.f32 %v974, %v1136
      %v1238 = vmax.f32 %v975, %v1139
      %v1239 = vmax.f32 %v976, %v1144
      %v1240 = vmax.f32 %v977, %v1147
      %v1241 = vmax.f32 %v978, %v1152
      %v1242 = vmax.f32 %v979, %v1155
      %v1243 = vmax.f32 %v980, %v1160
      %v1244 = vmax.f32 %v981, %v1163
      %v1245 = vmax.f32 %v982, %v1168
      %v1246 = vmax.f32 %v983, %v1171
      %v1247 = vmax.f32 %v984, %v1176
      %v1248 = vmax.f32 %v985, %v1179
      %v1249 = vmax.f32 %v986, %v1184
      %v1250 = vmax.f32 %v987, %v1187
      %v1251 = vmax.f32 %v988, %v1192
      %v1252 = vmax.f32 %v989, %v1195
      %v1253 = vmax.f32 %v990, %v1200
      %v1254 = vmax.f32 %v991, %v1203
      %v1255 = vmax.f32 %v992, %v1208
      %v1256 = vmax.f32 %v993, %v1211
      %v1257 = vmax.f32 %v994, %v1216
      %v1258 = vmax.f32 %v995, %v1219
      %v1259 = vmax.f32 %v996, %v1224
      %v1260 = vmax.f32 %v997, %v1227
      %v1261 = vmax.f32 %v998, %v1232
      %v1262 = vld [vmem:[%s2] sm:$0x1]
      %v1264 = vlaneseq
      %v1265 = vshrl.u32 %v1264, 7
      %v1266 = vsub.s32 0, %v1265
      %v1267 = vrot.slane %v1262, %v1266
      %v1269 = vadd.f32 %v1237, %v1267
      %v1270 = vadd.f32 %v1238, %v1267
      %v1271 = vadd.f32 %v1239, %v1267
      %v1272 = vadd.f32 %v1240, %v1267
      %v1273 = vadd.f32 %v1241, %v1267
      %v1274 = vadd.f32 %v1242, %v1267
      %v1275 = vadd.f32 %v1243, %v1267
      %v1276 = vadd.f32 %v1244, %v1267
      %v1277 = vadd.f32 %v1245, %v1267
      %v1278 = vadd.f32 %v1246, %v1267
      %v1279 = vadd.f32 %v1247, %v1267
      %v1280 = vadd.f32 %v1248, %v1267
      %v1281 = vadd.f32 %v1249, %v1267
      %v1282 = vadd.f32 %v1250, %v1267
      %v1283 = vadd.f32 %v1251, %v1267
      %v1284 = vadd.f32 %v1252, %v1267
      %v1285 = vadd.f32 %v1253, %v1267
      %v1286 = vadd.f32 %v1254, %v1267
      %v1287 = vadd.f32 %v1255, %v1267
      %v1288 = vadd.f32 %v1256, %v1267
      %v1289 = vadd.f32 %v1257, %v1267
      %v1290 = vadd.f32 %v1258, %v1267
      %v1291 = vadd.f32 %v1259, %v1267
      %v1292 = vadd.f32 %v1260, %v1267
      %v1293 = vadd.f32 %v1261, %v1267
      %v1294 = vmax.f32 %v1269, 0.0
      %v1295 = vmax.f32 %v1270, 0.0
      %v1296 = vmax.f32 %v1271, 0.0
      %v1297 = vmax.f32 %v1272, 0.0
      %v1298 = vmax.f32 %v1273, 0.0
      %v1299 = vmax.f32 %v1274, 0.0
      %v1300 = vmax.f32 %v1275, 0.0
      %v1301 = vmax.f32 %v1276, 0.0
      %v1302 = vmax.f32 %v1277, 0.0
      %v1303 = vmax.f32 %v1278, 0.0
      %v1304 = vmax.f32 %v1279, 0.0
      %v1305 = vmax.f32 %v1280, 0.0
      %v1306 = vmax.f32 %v1281, 0.0
      %v1307 = vmax.f32 %v1282, 0.0
      %v1308 = vmax.f32 %v1283, 0.0
      %v1309 = vmax.f32 %v1284, 0.0
      %v1310 = vmax.f32 %v1285, 0.0
      %v1311 = vmax.f32 %v1286, 0.0
      %v1312 = vmax.f32 %v1287, 0.0
      %v1313 = vmax.f32 %v1288, 0.0
      %v1314 = vmax.f32 %v1289, 0.0
      %v1315 = vmax.f32 %v1290, 0.0
      %v1316 = vmax.f32 %v1291, 0.0
      %v1317 = vmax.f32 %v1292, 0.0
      %v1318 = vmax.f32 %v1293, 0.0
      %v1319 = vpack.c.bf16 %v1295, %v1294
      %v1320 = vpack.c.bf16 %v1297, %v1296
      %v1321 = vpack.c.bf16 %v1299, %v1298
      %v1322 = vpack.c.bf16 %v1301, %v1300
      %v1323 = vpack.c.bf16 %v1303, %v1302
      %v1324 = vpack.c.bf16 %v1305, %v1304
      %v1325 = vpack.c.bf16 %v1307, %v1306
      %v1326 = vpack.c.bf16 %v1309, %v1308
      %v1327 = vpack.c.bf16 %v1311, %v1310
      %v1328 = vpack.c.bf16 %v1313, %v1312
      %v1329 = vpack.c.bf16 %v1315, %v1314
      %v1330 = vpack.c.bf16 %v1317, %v1316
      %v1331 = vpack.c.bf16 %v1318, %v1318
      %v1345 = vunpack.c.l.b16 %v1319
      %v1346 = vunpack.c.h.b16 %v1319
      %v1347 = vunpack.c.l.b16 %v1320
      %v1348 = vunpack.c.h.b16 %v1320
      %v1349 = vunpack.c.l.b16 %v1321
      %v1350 = vunpack.c.h.b16 %v1321
      %v1351 = vunpack.c.l.b16 %v1322
      %v1352 = vunpack.c.h.b16 %v1322
      %v1353 = vunpack.c.l.b16 %v1323
      %v1354 = vunpack.c.h.b16 %v1323
      %v1355 = vunpack.c.l.b16 %v1324
      %v1356 = vunpack.c.h.b16 %v1324
      %v1357 = vunpack.c.l.b16 %v1325
      %v1358 = vunpack.c.h.b16 %v1325
      %v1359 = vunpack.c.l.b16 %v1326
      %v1360 = vunpack.c.h.b16 %v1326
      %v1361 = vunpack.c.l.b16 %v1327
      %v1362 = vunpack.c.h.b16 %v1327
      %v1363 = vunpack.c.l.b16 %v1328
      %v1364 = vunpack.c.h.b16 %v1328
      %v1365 = vunpack.c.l.b16 %v1329
      %v1366 = vunpack.c.h.b16 %v1329
      %v1367 = vunpack.c.l.b16 %v1330
      %v1368 = vunpack.c.h.b16 %v1330
      %v1369 = vunpack.c.l.b16 %v1331
      %v1370 = vpack.c.b16 %v1345, %v1345
      %v1371 = vpack.c.b16 %v1346, %v1346
      %v1372 = vpack.c.b16 %v1347, %v1347
      %v1373 = vpack.c.b16 %v1348, %v1348
      %v1374 = vpack.c.b16 %v1349, %v1349
      %v1375 = vpack.c.b16 %v1350, %v1350
      %v1376 = vpack.c.b16 %v1351, %v1351
      %v1377 = vpack.c.b16 %v1352, %v1352
      %v1378 = vpack.c.b16 %v1353, %v1353
      %v1379 = vpack.c.b16 %v1354, %v1354
      %v1380 = vpack.c.b16 %v1355, %v1355
      %v1381 = vpack.c.b16 %v1356, %v1356
      %v1382 = vpack.c.b16 %v1357, %v1357
      %v1383 = vpack.c.b16 %v1358, %v1358
      %v1384 = vpack.c.b16 %v1359, %v1359
      %v1385 = vpack.c.b16 %v1360, %v1360
      %v1386 = vpack.c.b16 %v1361, %v1361
      %v1387 = vpack.c.b16 %v1362, %v1362
      %v1388 = vpack.c.b16 %v1363, %v1363
      %v1389 = vpack.c.b16 %v1364, %v1364
      %v1390 = vpack.c.b16 %v1365, %v1365
      %v1391 = vpack.c.b16 %v1366, %v1366
      %v1392 = vpack.c.b16 %v1367, %v1367
      %v1393 = vpack.c.b16 %v1368, %v1368
      %v1394 = vpack.c.b16 %v1369, %v1369
      %1420 = vst [vmem:[%s170] sm:$0xf] %v1370
      %1421 = vst [vmem:[%s170 + $0x4] sm:$0xf] %v1371
      %1422 = vst [vmem:[%s170 + $0x8] sm:$0xf] %v1372
      %1423 = vst [vmem:[%s170 + $0xc] sm:$0xf] %v1373
      %1424 = vst [vmem:[%s170 + $0x10] sm:$0xf] %v1374
      %1425 = vst [vmem:[%s170 + $0x14] sm:$0xf] %v1375
      %1426 = vst [vmem:[%s170 + $0x18] sm:$0xf] %v1376
      %1427 = vst [vmem:[%s170 + $0x1c] sm:$0xf] %v1377
      %1428 = vst [vmem:[%s170 + $0x20] sm:$0xf] %v1378
      %1429 = vst [vmem:[%s170 + $0x24] sm:$0xf] %v1379
      %1430 = vst [vmem:[%s170 + $0x28] sm:$0xf] %v1380
      %1431 = vst [vmem:[%s170 + $0x2c] sm:$0xf] %v1381
      %1432 = vst [vmem:[%s170 + $0x30] sm:$0xf] %v1382
      %1433 = vst [vmem:[%s170 + $0x34] sm:$0xf] %v1383
      %1434 = vst [vmem:[%s170 + $0x38] sm:$0xf] %v1384
      %1435 = vst [vmem:[%s170 + $0x3c] sm:$0xf] %v1385
      %1436 = vst [vmem:[%s170 + $0x40] sm:$0xf] %v1386
      %1437 = vst [vmem:[%s170 + $0x44] sm:$0xf] %v1387
      %1438 = vst [vmem:[%s170 + $0x48] sm:$0xf] %v1388
      %1439 = vst [vmem:[%s170 + $0x4c] sm:$0xf] %v1389
      %1440 = vst [vmem:[%s170 + $0x50] sm:$0xf] %v1390
      %1441 = vst [vmem:[%s170 + $0x54] sm:$0xf] %v1391
      %1442 = vst [vmem:[%s170 + $0x58] sm:$0xf] %v1392
      %1443 = vst [vmem:[%s170 + $0x5c] sm:$0xf] %v1393
      %1444 = vst [vmem:[%s170 + $0x60] sm:$0x3] %v1394
      %p1445 = scmp.lt.s32.totalorder %s14, 1
      %s1446 = scalar_select %p1445, %s14, 1
      %s1447 = smul.addr %s1446, 25
      %s1448 = smul.addr %s1447, 4
      %s1449 = scalar_lea.vmem %s3, %s1448
      // Predicated region
      $region33: #{net_forward.3} parent=31 // pred_check
        %p1450 = pneg %p100
      $region34: #{net_forward.3} parent=31 // pred_check_branch
        %1452 = sbr.rel (%p1450) target = $region36
      $region35: #{net_forward.3} parent=31 // pred_region
        _
      $region36: #{net_forward.3} parent=31 // pred_fallthru
        _
    $region32: #{net_forward.3} parent=5 // pred_fallthru
      _
    %p1453 = scmp.le.s32.totalorder 2, %s9
    // Predicated region
    $region37: #{net_forward.3} parent=5 // pred_check
      %p1454 = pneg %p1453
    $region38: #{net_forward.3} parent=5 // pred_check_branch
      %1456 = sbr.rel (%p1454) target = $region40
    $region39: #{net_forward.3} parent=5 // pred_region
      %s1457 = ssub.s32 %s9, 2
      // Predicated region
      $region41: #{net_forward.3} parent=39 // pred_check
        %p1458 = pneg %p106
      $region42: #{net_forward.3} parent=39 // pred_check_branch
        %1460 = sbr.rel (%p1458) target = $region44
      $region43: #{net_forward.3} parent=39 // pred_region
        %p1461 = scmp.lt.s32.totalorder %s15, 1
        %s1462 = scalar_select %p1461, %s15, 1
        %s1463 = smul.addr %s1462, 25
        %s1464 = smul.addr %s1463, 4
        %s1465 = scalar_lea.vmem %s3, %s1464
      $region44: #{net_forward.3} parent=39 // pred_fallthru
        _
    $region40: #{net_forward.3} parent=5 // pred_fallthru
      _
  $region6: #{net_forward.3} parent=0 // loop_footer
    %s13 = sadd.s32 1, %s9
  $region7: #{net_forward.3} parent=0 // loop_footer_branch
    %8 = sbr.rel target = $region3
  $region8: #{net_forward.3} parent=0 // loop_exit
    _

// kernel: net_forward.4
$region0: #{net_forward.4}
  #allocation0 [shape = 'u32[]', space=smem, size = 0x4, offset = 0x4, fixed_abs, tag = 'smem constant byte address 0x4 - core index']
  #allocation1 [shape = 'u32[144,128]{1,0:T(1,128)}', space=vmem, size = 0x12000, scoped, tag = 'internal scratch']
  %s0 = inlined_call_operand.vmem [shape: bf16[2,4,25,256], index: 0, kind: input, shape index: {}]
  %s1 = inlined_call_operand.vmem [shape: bf16[256,128], index: 1, kind: input, shape index: {}]
  %s2 = inlined_call_operand.vmem [shape: f32[1,128], index: 2, kind: input, shape index: {}]
  %s3 = inlined_call_operand.vmem [shape: bf16[2,25,128], index: 3, kind: output, shape index: {}]
  %s4 = sld [smem:[#allocation0]]
  $region45: #{net_forward.4} parent=0
    _
  %s6 = ssub.s32 1, %s4
  %s7 = scalar_select 0, %s6, %s4
  loop: start=0, step=1, limit=4
  $region2: #{net_forward.4} parent=0 // loop_pre_header
    _
  $region3: #{net_forward.4} parent=0 // loop_header
    %s9 = sphi 0, %s13
    %p10 = scmp.ge.s32.totalorder %s9, 4
    %s19 = sphi 0, %s21
    %s22 = sphi 0, %s19
    %s23 = sphi 0, %s22
    %s39 = sphi 0, %s23
    %s43 = sphi 0, %s43
    %s45 = sphi 0, %s43
    %s46 = sphi 0, %s45
    %s60 = sphi 0, %s46
    %s64 = sphi 0, %s64
    %s66 = sphi 0, %s64
    %s67 = sphi 0, %s66
    %s81 = sphi 0, %s67
    %s87 = sphi 0, %s89
    %s90 = sphi 0, %s87
    %s91 = sphi 0, %s90
    %s107 = sphi 0, %s91
  $region4: #{net_forward.4} parent=0 // loop_header_branch
    %12 = sbr.rel (%p10) target = $region8
  $region5: #{net_forward.4} parent=0 // loop_body
    %s14 = ssub.s32 %s9, 1
    %s15 = ssub.s32 %s9, 2
    %s16 = sadd.s32 %s9, 1
    %s17 = ssub.s32 %s9, %s16
    %p18 = scmp.eq.s32.totalorder %s17, 0
    %s20 = sadd.s32 %s19, 1
    %s21 = scalar_select %p18, %s19, %s20
    %p24 = pneg %p18
    %p25 = scmp.eq.s32.totalorder %s9, 1
    %p26 = por %p24, %p25
    %p27 = scmp.ne.s32.totalorder %s19, %s22
    %p28 = scmp.eq.s32.totalorder %s9, 0
    %p29 = por %p27, %p28
    %p30 = scmp.ne.s32.totalorder %s19, %s22
    %p31 = scmp.eq.s32.totalorder %s14, 1
    %p32 = por %p30, %p31
    %p33 = scmp.ne.s32.totalorder %s22, %s23
    %p34 = scmp.eq.s32.totalorder %s14, 0
    %p35 = por %p33, %p34
    %p36 = scmp.ne.s32.totalorder %s22, %s23
    %p37 = scmp.eq.s32.totalorder %s15, 1
    %p38 = por %p36, %p37
    %p40 = scmp.ne.s32.totalorder %s23, %s39
    %p41 = scmp.eq.s32.totalorder %s15, 0
    %p42 = por %p40, %p41
    %s44 = sadd.s32 %s43, 1
    %p47 = scmp.eq.s32.totalorder %s9, 1
    %p48 = scmp.ne.s32.totalorder %s43, %s45
    %p49 = scmp.eq.s32.totalorder %s9, 0
    %p50 = por %p48, %p49
    %p51 = scmp.ne.s32.totalorder %s43, %s45
    %p52 = scmp.eq.s32.totalorder %s14, 1
    %p53 = por %p51, %p52
    %p54 = scmp.ne.s32.totalorder %s45, %s46
    %p55 = scmp.eq.s32.totalorder %s14, 0
    %p56 = por %p54, %p55
    %p57 = scmp.ne.s32.totalorder %s45, %s46
    %p58 = scmp.eq.s32.totalorder %s15, 1
    %p59 = por %p57, %p58
    %p61 = scmp.ne.s32.totalorder %s46, %s60
    %p62 = scmp.eq.s32.totalorder %s15, 0
    %p63 = por %p61, %p62
    %s65 = sadd.s32 %s64, 1
    %p68 = scmp.eq.s32.totalorder %s9, 1
    %p69 = scmp.ne.s32.totalorder %s64, %s66
    %p70 = scmp.eq.s32.totalorder %s9, 0
    %p71 = por %p69, %p70
    %p72 = scmp.ne.s32.totalorder %s64, %s66
    %p73 = scmp.eq.s32.totalorder %s14, 1
    %p74 = por %p72, %p73
    %p75 = scmp.ne.s32.totalorder %s66, %s67
    %p76 = scmp.eq.s32.totalorder %s14, 0
    %p77 = por %p75, %p76
    %p78 = scmp.ne.s32.totalorder %s66, %s67
    %p79 = scmp.eq.s32.totalorder %s15, 1
    %p80 = por %p78, %p79
    %p82 = scmp.ne.s32.totalorder %s67, %s81
    %p83 = scmp.eq.s32.totalorder %s15, 0
    %p84 = por %p82, %p83
    %s85 = ssub.s32 %s9, %s16
    %p86 = scmp.eq.s32.totalorder %s85, 0
    %s88 = sadd.s32 %s87, 1
    %s89 = scalar_select %p86, %s87, %s88
    %p92 = pneg %p86
    %p93 = scmp.eq.s32.totalorder %s9, 1
    %p94 = por %p92, %p93
    %p95 = scmp.ne.s32.totalorder %s87, %s90
    %p96 = scmp.eq.s32.totalorder %s9, 0
    %p97 = por %p95, %p96
    %p98 = scmp.ne.s32.totalorder %s87, %s90
    %p99 = scmp.eq.s32.totalorder %s14, 1
    %p100 = por %p98, %p99
    %p101 = scmp.ne.s32.totalorder %s90, %s91
    %p102 = scmp.eq.s32.totalorder %s14, 0
    %p103 = por %p101, %p102
    %p104 = scmp.ne.s32.totalorder %s90, %s91
    %p105 = scmp.eq.s32.totalorder %s15, 1
    %p106 = por %p104, %p105
    %p108 = scmp.ne.s32.totalorder %s91, %s107
    %p109 = scmp.eq.s32.totalorder %s15, 0
    %p110 = por %p108, %p109
    %p111 = scmp.le.s32.totalorder 1, %s9
    %p112 = scmp.lt.s32.totalorder %s9, 3
    %p113 = pnand %p111, %p112
    %p114 = pneg %p113
    // Predicated region
    $region9: #{net_forward.4} parent=5 // pred_check
      _
    $region10: #{net_forward.4} parent=5 // pred_check_branch
      %116 = sbr.rel (%p113) target = $region12
    $region11: #{net_forward.4} parent=5 // pred_region
      %s117 = ssub.s32 %s9, 1
      // Predicated region
      $region13: #{net_forward.4} parent=11 // pred_check
        %p118 = pneg %p56
      $region14: #{net_forward.4} parent=11 // pred_check_branch
        %120 = sbr.rel (%p118) target = $region16
      $region15: #{net_forward.4} parent=11 // pred_region
        _
      $region16: #{net_forward.4} parent=11 // pred_fallthru
        _
      // Predicated region
      $region17: #{net_forward.4} parent=11 // pred_check
        %p121 = pneg %p77
      $region18: #{net_forward.4} parent=11 // pred_check_branch
        %123 = sbr.rel (%p121) target = $region20
      $region19: #{net_forward.4} parent=11 // pred_region
        _
      $region20: #{net_forward.4} parent=11 // pred_fallthru
        _
    $region12: #{net_forward.4} parent=5 // pred_fallthru
      _
    %p124 = scmp.lt.s32.totalorder %s9, 2
    // Predicated region
    $region21: #{net_forward.4} parent=5 // pred_check
      %p125 = pneg %p124
    $region22: #{net_forward.4} parent=5 // pred_check_branch
      %127 = sbr.rel (%p125) target = $region24
    $region23: #{net_forward.4} parent=5 // pred_region
      // Predicated region
      $region25: #{net_forward.4} parent=23 // pred_check
        %p128 = pneg %p29
      $region26: #{net_forward.4} parent=23 // pred_check_branch
        %130 = sbr.rel (%p128) target = $region28
      $region27: #{net_forward.4} parent=23 // pred_region
        %p131 = scmp.lt.s32.totalorder %s9, 1
        %s132 = scalar_select %p131, %s9, 1
        %s133 = smul.addr %s132, 32
        %s134 = smul.addr %s133, 4
        %s135 = scalar_lea.vmem %s0, %s134
      $region28: #{net_forward.4} parent=23 // pred_fallthru
        _
    $region24: #{net_forward.4} parent=5 // pred_fallthru
      _
    %p136 = scmp.le.s32.totalorder 1, %s9
    %p137 = scmp.lt.s32.totalorder %s9, 3
    %p138 = pnand %p136, %p137
    %p139 = pneg %p138
    // Predicated region
    $region29: #{net_forward.4} parent=5 // pred_check
      _
    $region30: #{net_forward.4} parent=5 // pred_check_branch
      %141 = sbr.rel (%p138) target = $region32
    $region31: #{net_forward.4} parent=5 // pred_region
      %s142 = ssub.s32 %s9, 1
      %p143 = scmp.lt.s32.totalorder %s14, 1
      %s144 = scalar_select %p143, %s14, 1
      %s145 = smul.addr %s144, 32
      %s146 = smul.addr %s145, 4
      %s147 = scalar_lea.vmem %s0, %s146
      %p148 = pneg %p35
      %p149 = pneg %p32
      %p150 = pneg %p56
      %p151 = pneg %p53
      %p152 = pneg %p77
      %p153 = pneg %p74
      %p154 = pneg %p103
      %p155 = pneg %p100
      %p156 = scmp.lt.s32.totalorder %s14, 1
      %s157 = scalar_select %p156, %s14, 1
      %s158 = smul.addr %s157, 4
      %s159 = smul.addr %s158, 4
      %s160 = scalar_lea.vmem %s3, %s159
      %p161 = scmp.lt.s32.totalorder %s14, 1
      %s162 = scalar_select %p161, %s14, 1
      %s163 = smul.addr %s162, 32
      %s164 = smul.addr %s163, 4
      %s165 = scalar_lea.vmem %s0, %s164
      %p166 = scmp.lt.s32.totalorder %s14, 1
      %s167 = scalar_select %p166, %s14, 1
      %s168 = smul.addr %s167, 4
      %s169 = smul.addr %s168, 4
      %s170 = scalar_lea.vmem %s3, %s169
      %v172 = vld [vmem:[%s1] sm:$0xf]
      %v173 = vld [vmem:[%s1 + $0x4] sm:$0xf]
      %v174 = vld [vmem:[%s1 + $0x8] sm:$0xf]
      %v175 = vld [vmem:[%s1 + $0xc] sm:$0xf]
      %v176 = vld [vmem:[%s1 + $0x10] sm:$0xf]
      %v177 = vld [vmem:[%s1 + $0x14] sm:$0xf]
      %v178 = vld [vmem:[%s1 + $0x18] sm:$0xf]
      %v179 = vld [vmem:[%s1 + $0x1c] sm:$0xf]
      %v180 = vld [vmem:[%s1 + $0x20] sm:$0xf]
      %v181 = vld [vmem:[%s1 + $0x24] sm:$0xf]
      %v182 = vld [vmem:[%s1 + $0x28] sm:$0xf]
      %v183 = vld [vmem:[%s1 + $0x2c] sm:$0xf]
      %v184 = vld [vmem:[%s1 + $0x30] sm:$0xf]
      %v185 = vld [vmem:[%s1 + $0x34] sm:$0xf]
      %v186 = vld [vmem:[%s1 + $0x38] sm:$0xf]
      %v187 = vld [vmem:[%s1 + $0x3c] sm:$0xf]
      %v188 = vld [vmem:[%s1 + $0x40] sm:$0xf]
      %v189 = vld [vmem:[%s1 + $0x44] sm:$0xf]
      %v190 = vld [vmem:[%s1 + $0x48] sm:$0xf]
      %v191 = vld [vmem:[%s1 + $0x4c] sm:$0xf]
      %v192 = vld [vmem:[%s1 + $0x50] sm:$0xf]
      %v193 = vld [vmem:[%s1 + $0x54] sm:$0xf]
      %v194 = vld [vmem:[%s1 + $0x58] sm:$0xf]
      %v195 = vld [vmem:[%s1 + $0x5c] sm:$0xf]
      %v196 = vld [vmem:[%s1 + $0x60] sm:$0xf]
      %v197 = vld [vmem:[%s1 + $0x64] sm:$0xf]
      %v198 = vld [vmem:[%s1 + $0x68] sm:$0xf]
      %v199 = vld [vmem:[%s1 + $0x6c] sm:$0xf]
      %v200 = vld [vmem:[%s1 + $0x70] sm:$0xf]
      %v201 = vld [vmem:[%s1 + $0x74] sm:$0xf]
      %v202 = vld [vmem:[%s1 + $0x78] sm:$0xf]
      %v203 = vld [vmem:[%s1 + $0x7c] sm:$0xf]
      %v204 = vld [vmem:[%s165] sm:$0xff]
      %v205 = vld [vmem:[%s165 + $0x8] sm:$0xff]
      %v206 = vld [vmem:[%s165 + $0x10] sm:$0xff]
      %v207 = vld [vmem:[%s165 + $0x18] sm:$0x11]
      %v212 = vunpack.c.l.b16 %v204
      %v213 = vunpack.c.h.b16 %v204
      %v214 = vunpack.c.l.b16 %v205
      %v215 = vunpack.c.h.b16 %v205
      %v216 = vunpack.c.l.b16 %v206
      %v217 = vunpack.c.h.b16 %v206
      %v218 = vunpack.c.l.b16 %v207
      %v219 = vunpack.c.h.b16 %v207
      %v220 = vpack.c.b16 %v214, %v212
      %v221 = vpack.c.b16 %v215, %v213
      %v222 = vpack.c.b16 %v218, %v216
      %v223 = vpack.c.b16 %v219, %v217
      %v260 = vunpack.c.l.b16 %v172
      %v261 = vunpack.c.l.b16 %v173
      %v262 = vunpack.c.l.b16 %v174
      %v263 = vunpack.c.l.b16 %v175
      %v264 = vunpack.c.l.b16 %v176
      %v265 = vunpack.c.l.b16 %v177
      %v266 = vunpack.c.l.b16 %v178
      %v267 = vunpack.c.l.b16 %v179
      %v268 = vunpack.c.l.b16 %v180
      %v269 = vunpack.c.l.b16 %v181
      %v270 = vunpack.c.l.b16 %v182
      %v271 = vunpack.c.l.b16 %v183
      %v272 = vunpack.c.l.b16 %v184
      %v273 = vunpack.c.l.b16 %v185
      %v274 = vunpack.c.l.b16 %v186
      %v275 = vunpack.c.l.b16 %v187
      %v276 = vunpack.c.l.b16 %v188
      %v277 = vunpack.c.l.b16 %v189
      %v278 = vunpack.c.l.b16 %v190
      %v279 = vunpack.c.l.b16 %v191
      %v280 = vunpack.c.l.b16 %v192
      %v281 = vunpack.c.l.b16 %v193
      %v282 = vunpack.c.l.b16 %v194
      %v283 = vunpack.c.l.b16 %v195
      %v284 = vunpack.c.l.b16 %v196
      %v285 = vunpack.c.l.b16 %v197
      %v286 = vunpack.c.l.b16 %v198
      %v287 = vunpack.c.l.b16 %v199
      %v288 = vunpack.c.l.b16 %v200
      %v289 = vunpack.c.l.b16 %v201
      %v290 = vunpack.c.l.b16 %v202
      %v291 = vunpack.c.l.b16 %v203
      %v292 = vpack.c.b16 %v261, %v260
      %v293 = vpack.c.b16 %v263, %v262
      %v294 = vpack.c.b16 %v265, %v264
      %v295 = vpack.c.b16 %v267, %v266
      %v296 = vpack.c.b16 %v269, %v268
      %v297 = vpack.c.b16 %v271, %v270
      %v298 = vpack.c.b16 %v273, %v272
      %v299 = vpack.c.b16 %v275, %v274
      %v300 = vpack.c.b16 %v277, %v276
      %v301 = vpack.c.b16 %v279, %v278
      %v302 = vpack.c.b16 %v281, %v280
      %v303 = vpack.c.b16 %v283, %v282
      %v304 = vpack.c.b16 %v285, %v284
      %v305 = vpack.c.b16 %v287, %v286
      %v306 = vpack.c.b16 %v289, %v288
      %v307 = vpack.c.b16 %v291, %v290
      %324 = vmatprep.subr.bf16.mxu0 0
      %325 = vmatpush1.bf16.msra.mxu0 %v292
      %326 = vmatprep.subr.bf16.mxu0 0
      %327 = vmatpush1.bf16.msra.mxu0 %v293
      %328 = vmatprep.subr.bf16.mxu0 0
      %329 = vmatpush1.bf16.msra.mxu0 %v294
      %330 = vmatprep.subr.bf16.mxu0 0
      %331 = vmatpush1.bf16.msra.mxu0 %v295
      %332 = vmatprep.subr.bf16.mxu0 0
      %333 = vmatpush1.bf16.msra.mxu0 %v296
      %334 = vmatprep.subr.bf16.mxu0 0
      %335 = vmatpush1.bf16.msra.mxu0 %v297
      %336 = vmatprep.subr.bf16.mxu0 0
      %337 = vmatpush1.bf16.msra.mxu0 %v298
      %338 = vmatprep.subr.bf16.mxu0 0
      %339 = vmatpush1.bf16.msra.mxu0 %v299
      %340 = vmatprep.subr.bf16.mxu0 0
      %341 = vmatpush1.bf16.msra.mxu0 %v300
      %342 = vmatprep.subr.bf16.mxu0 0
      %343 = vmatpush1.bf16.msra.mxu0 %v301
      %344 = vmatprep.subr.bf16.mxu0 0
      %345 = vmatpush1.bf16.msra.mxu0 %v302
      %346 = vmatprep.subr.bf16.mxu0 0
      %347 = vmatpush1.bf16.msra.mxu0 %v303
      %348 = vmatprep.subr.bf16.mxu0 0
      %349 = vmatpush1.bf16.msra.mxu0 %v304
      %350 = vmatprep.subr.bf16.mxu0 0
      %351 = vmatpush1.bf16.msra.mxu0 %v305
      %352 = vmatprep.subr.bf16.mxu0 0
      %353 = vmatpush1.bf16.msra.mxu0 %v306
      %354 = vmatprep.subr.bf16.mxu0 0
      %355 = vmatpush1.bf16.msra.mxu0 %v307
      %356 = vmatprep.mubr.bf16.mxu0 %v221
      %357 = vmatmul.mubr.bf16.gmra.mrb[0].mxu0 %v220
      %v358 = vpop.f32.mrb[0].mxu0
      %v359 = vadd.f32 0.0, %v358
      %v360 = vpop.f32.mrb[0].mxu0
      %v361 = vpop.f32.mrb[0].mxu0
      %v362 = vadd.f32 0.0, %v361
      %v363 = vpop.f32.mrb[0].mxu0
      %364 = vmatprep.mubr.bf16.mxu0 %v223
      %365 = vmatmul.mubr.bf16.gmra.mrb[0].mxu0 %v222
      %v366 = vpop.f32.mrb[0].mxu0
      %v367 = vadd.f32 0.0, %v366
      %v368 = vpop.f32.mrb[0].mxu0
      %v369 = vpop.f32.mrb[0].mxu0
      %v370 = vadd.f32 0.0, %v369
      %v371 = vpop.f32.mrb[0].mxu0
      %372 = vdwg.mxu0
      %s373 = scalar_lea.vmem %s165, 32
      %v374 = vld [vmem:[%s373] sm:$0xff]
      %v375 = vld [vmem:[%s373 + $0x8] sm:$0xff]
      %v376 = vld [vmem:[%s373 + $0x10] sm:$0xff]
      %v377 = vld [vmem:[%s373 + $0x18] sm:$0x11]
      %v382 = vunpack.c.l.b16 %v374
      %v383 = vunpack.c.h.b16 %v374
      %v384 = vunpack.c.l.b16 %v375
      %v385 = vunpack.c.h.b16 %v375
      %v386 = vunpack.c.l.b16 %v376
      %v387 = vunpack.c.h.b16 %v376
      %v388 = vunpack.c.l.b16 %v377
      %v389 = vunpack.c.h.b16 %v377
      %v390 = vpack.c.b16 %v384, %v382
      %v391 = vpack.c.b16 %v385, %v383
      %v392 = vpack.c.b16 %v388, %v386
      %v393 = vpack.c.b16 %v389, %v387
      %398 = vmatprep.subr.bf16.mxu0 0
      %399 = vmatpush1.bf16.msra.mxu0 %v292
      %400 = vmatprep.subr.bf16.mxu0 0
      %401 = vmatpush1.bf16.msra.mxu0 %v293
      %402 = vmatprep.subr.bf16.mxu0 0
      %403 = vmatpush1.bf16.msra.mxu0 %v294
      %404 = vmatprep.subr.bf16.mxu0 0
      %405 = vmatpush1.bf16.msra.mxu0 %v295
      %406 = vmatprep.subr.bf16.mxu0 0
      %407 = vmatpush1.bf16.msra.mxu0 %v296
      %408 = vmatprep.subr.bf16.mxu0 0
      %409 = vmatpush1.bf16.msra.mxu0 %v297
      %410 = vmatprep.subr.bf16.mxu0 0
      %411 = vmatpush1.bf16.msra.mxu0 %v298
      %412 = vmatprep.subr.bf16.mxu0 0
      %413 = vmatpush1.bf16.msra.mxu0 %v299
      %414 = vmatprep.subr.bf16.mxu0 0
      %415 = vmatpush1.bf16.msra.mxu0 %v300
      %416 = vmatprep.subr.bf16.mxu0 0
      %417 = vmatpush1.bf16.msra.mxu0 %v301
      %418 = vmatprep.subr.bf16.mxu0 0
      %419 = vmatpush1.bf16.msra.mxu0 %v302
      %420 = vmatprep.subr.bf16.mxu0 0
      %421 = vmatpush1.bf16.msra.mxu0 %v303
      %422 = vmatprep.subr.bf16.mxu0 0
      %423 = vmatpush1.bf16.msra.mxu0 %v304
      %424 = vmatprep.subr.bf16.mxu0 0
      %425 = vmatpush1.bf16.msra.mxu0 %v305
      %426 = vmatprep.subr.bf16.mxu0 0
      %427 = vmatpush1.bf16.msra.mxu0 %v306
      %428 = vmatprep.subr.bf16.mxu0 0
      %429 = vmatpush1.bf16.msra.mxu0 %v307
      %430 = vmatprep.mubr.bf16.mxu0 %v391
      %431 = vmatmul.mubr.bf16.gmra.mrb[0].mxu0 %v390
      %v432 = vpop.f32.mrb[0].mxu0
      %v433 = vadd.f32 0.0, %v432
      %v434 = vpop.f32.mrb[0].mxu0
      %v435 = vpop.f32.mrb[0].mxu0
      %v436 = vadd.f32 0.0, %v435
      %v437 = vpop.f32.mrb[0].mxu0
      %438 = vmatprep.mubr.bf16.mxu0 %v393
      %439 = vmatmul.mubr.bf16.gmra.mrb[0].mxu0 %v392
      %v440 = vpop.f32.mrb[0].mxu0
      %v441 = vadd.f32 0.0, %v440
      %v442 = vpop.f32.mrb[0].mxu0
      %v443 = vpop.f32.mrb[0].mxu0
      %v444 = vadd.f32 0.0, %v443
      %v445 = vpop.f32.mrb[0].mxu0
      %446 = vdwg.mxu0
      %v447 = vmax.f32 %v359, %v433
      %v448 = vmax.f32 %v362, %v436
      %v449 = vmax.f32 %v367, %v441
      %v450 = vmax.f32 %v370, %v444
      %s451 = scalar_lea.vmem %s165, 64
      %v452 = vld [vmem:[%s451] sm:$0xff]
      %v453 = vld [vmem:[%s451 + $0x8] sm:$0xff]
      %v454 = vld [vmem:[%s451 + $0x10] sm:$0xff]
      %v455 = vld [vmem:[%s451 + $0x18] sm:$0x11]
      %v460 = vunpack.c.l.b16 %v452
      %v461 = vunpack.c.h.b16 %v452
      %v462 = vunpack.c.l.b16 %v453
      %v463 = vunpack.c.h.b16 %v453
      %v464 = vunpack.c.l.b16 %v454
      %v465 = vunpack.c.h.b16 %v454
      %v466 = vunpack.c.l.b16 %v455
      %v467 = vunpack.c.h.b16 %v455
      %v468 = vpack.c.b16 %v462, %v460
      %v469 = vpack.c.b16 %v463, %v461
      %v470 = vpack.c.b16 %v466, %v464
      %v471 = vpack.c.b16 %v467, %v465
      %476 = vmatprep.subr.bf16.mxu0 0
      %477 = vmatpush1.bf16.msra.mxu0 %v292
      %478 = vmatprep.subr.bf16.mxu0 0
      %479 = vmatpush1.bf16.msra.mxu0 %v293
      %480 = vmatprep.subr.bf16.mxu0 0
      %481 = vmatpush1.bf16.msra.mxu0 %v294
      %482 = vmatprep.subr.bf16.mxu0 0
      %483 = vmatpush1.bf16.msra.mxu0 %v295
      %484 = vmatprep.subr.bf16.mxu0 0
      %485 = vmatpush1.bf16.msra.mxu0 %v296
      %486 = vmatprep.subr.bf16.mxu0 0
      %487 = vmatpush1.bf16.msra.mxu0 %v297
      %488 = vmatprep.subr.bf16.mxu0 0
      %489 = vmatpush1.bf16.msra.mxu0 %v298
      %490 = vmatprep.subr.bf16.mxu0 0
      %491 = vmatpush1.bf16.msra.mxu0 %v299
      %492 = vmatprep.subr.bf16.mxu0 0
      %493 = vmatpush1.bf16.msra.mxu0 %v300
      %494 = vmatprep.subr.bf16.mxu0 0
      %495 = vmatpush1.bf16.msra.mxu0 %v301
      %496 = vmatprep.subr.bf16.mxu0 0
      %497 = vmatpush1.bf16.msra.mxu0 %v302
      %498 = vmatprep.subr.bf16.mxu0 0
      %499 = vmatpush1.bf16.msra.mxu0 %v303
      %500 = vmatprep.subr.bf16.mxu0 0
      %501 = vmatpush1.bf16.msra.mxu0 %v304
      %502 = vmatprep.subr.bf16.mxu0 0
      %503 = vmatpush1.bf16.msra.mxu0 %v305
      %504 = vmatprep.subr.bf16.mxu0 0
      %505 = vmatpush1.bf16.msra.mxu0 %v306
      %506 = vmatprep.subr.bf16.mxu0 0
      %507 = vmatpush1.bf16.msra.mxu0 %v307
      %508 = vmatprep.mubr.bf16.mxu0 %v469
      %509 = vmatmul.mubr.bf16.gmra.mrb[0].mxu0 %v468
      %v510 = vpop.f32.mrb[0].mxu0
      %v511 = vadd.f32 0.0, %v510
      %v512 = vpop.f32.mrb[0].mxu0
      %v513 = vpop.f32.mrb[0].mxu0
      %v514 = vadd.f32 0.0, %v513
      %v515 = vpop.f32.mrb[0].mxu0
      %516 = vmatprep.mubr.bf16.mxu0 %v471
      %517 = vmatmul.mubr.bf16.gmra.mrb[0].mxu0 %v470
      %v518 = vpop.f32.mrb[0].mxu0
      %v519 = vadd.f32 0.0, %v518
      %v520 = vpop.f32.mrb[0].mxu0
      %v521 = vpop.f32.mrb[0].mxu0
      %v522 = vadd.f32 0.0, %v521
      %v523 = vpop.f32.mrb[0].mxu0
      %524 = vdwg.mxu0
      %v525 = vmax.f32 %v447, %v511
      %v526 = vmax.f32 %v448, %v514
      %v527 = vmax.f32 %v449, %v519
      %v528 = vmax.f32 %v450, %v522
      %s529 = scalar_lea.vmem %s165, 96
      %v530 = vld [vmem:[%s529] sm:$0xff]
      %v531 = vld [vmem:[%s529 + $0x8] sm:$0xff]
      %v532 = vld [vmem:[%s529 + $0x10] sm:$0xff]
      %v533 = vld [vmem:[%s529 + $0x18] sm:$0x11]
      %v538 = vunpack.c.l.b16 %v530
      %v539 = vunpack.c.h.b16 %v530
      %v540 = vunpack.c.l.b16 %v531
      %v541 = vunpack.c.h.b16 %v531
      %v542 = vunpack.c.l.b16 %v532
      %v543 = vunpack.c.h.b16 %v532
      %v544 = vunpack.c.l.b16 %v533
      %v545 = vunpack.c.h.b16 %v533
      %v546 = vpack.c.b16 %v540, %v538
      %v547 = vpack.c.b16 %v541, %v539
      %v548 = vpack.c.b16 %v544, %v542
      %v549 = vpack.c.b16 %v545, %v543
      %554 = vmatprep.subr.bf16.mxu0 0
      %555 = vmatpush1.bf16.msra.mxu0 %v292
      %556 = vmatprep.subr.bf16.mxu0 0
      %557 = vmatpush1.bf16.msra.mxu0 %v293
      %558 = vmatprep.subr.bf16.mxu0 0
      %559 = vmatpush1.bf16.msra.mxu0 %v294
      %560 = vmatprep.subr.bf16.mxu0 0
      %561 = vmatpush1.bf16.msra.mxu0 %v295
      %562 = vmatprep.subr.bf16.mxu0 0
      %563 = vmatpush1.bf16.msra.mxu0 %v296
      %564 = vmatprep.subr.bf16.mxu0 0
      %565 = vmatpush1.bf16.msra.mxu0 %v297
      %566 = vmatprep.subr.bf16.mxu0 0
      %567 = vmatpush1.bf16.msra.mxu0 %v298
      %568 = vmatprep.subr.bf16.mxu0 0
      %569 = vmatpush1.bf16.msra.mxu0 %v299
      %570 = vmatprep.subr.bf16.mxu0 0
      %571 = vmatpush1.bf16.msra.mxu0 %v300
      %572 = vmatprep.subr.bf16.mxu0 0
      %573 = vmatpush1.bf16.msra.mxu0 %v301
      %574 = vmatprep.subr.bf16.mxu0 0
      %575 = vmatpush1.bf16.msra.mxu0 %v302
      %576 = vmatprep.subr.bf16.mxu0 0
      %577 = vmatpush1.bf16.msra.mxu0 %v303
      %578 = vmatprep.subr.bf16.mxu0 0
      %579 = vmatpush1.bf16.msra.mxu0 %v304
      %580 = vmatprep.subr.bf16.mxu0 0
      %581 = vmatpush1.bf16.msra.mxu0 %v305
      %582 = vmatprep.subr.bf16.mxu0 0
      %583 = vmatpush1.bf16.msra.mxu0 %v306
      %584 = vmatprep.subr.bf16.mxu0 0
      %585 = vmatpush1.bf16.msra.mxu0 %v307
      %586 = vmatprep.mubr.bf16.mxu0 %v547
      %587 = vmatmul.mubr.bf16.gmra.mrb[0].mxu0 %v546
      %v588 = vpop.f32.mrb[0].mxu0
      %v589 = vadd.f32 0.0, %v588
      %v590 = vpop.f32.mrb[0].mxu0
      %v591 = vpop.f32.mrb[0].mxu0
      %v592 = vadd.f32 0.0, %v591
      %v593 = vpop.f32.mrb[0].mxu0
      %594 = vmatprep.mubr.bf16.mxu0 %v549
      %595 = vmatmul.mubr.bf16.gmra.mrb[0].mxu0 %v548
      %v596 = vpop.f32.mrb[0].mxu0
      %v597 = vadd.f32 0.0, %v596
      %v598 = vpop.f32.mrb[0].mxu0
      %v599 = vpop.f32.mrb[0].mxu0
      %v600 = vadd.f32 0.0, %v599
      %v601 = vpop.f32.mrb[0].mxu0
      %602 = vdwg.mxu0
      %v603 = vmax.f32 %v525, %v589
      %v604 = vmax.f32 %v526, %v592
      %v605 = vmax.f32 %v527, %v597
      %v606 = vmax.f32 %v528, %v600
      %v607 = vld [vmem:[%s2] sm:$0x1]
      %v609 = vlaneseq
      %v610 = vshrl.u32 %v609, 7
      %v611 = vsub.s32 0, %v610
      %v612 = vrot.slane %v607, %v611
      %v614 = vadd.f32 %v603, %v612
      %v615 = vadd.f32 %v604, %v612
      %v616 = vadd.f32 %v605, %v612
      %v617 = vadd.f32 %v606, %v612
      %v618 = vmax.f32 %v614, 0.0
      %v619 = vmax.f32 %v615, 0.0
      %v620 = vmax.f32 %v616, 0.0
      %v621 = vmax.f32 %v617, 0.0
      %v622 = vpack.c.bf16 %v619, %v618
      %v623 = vpack.c.bf16 %v621, %v620
      %v626 = vunpack.c.l.b16 %v622
      %v627 = vunpack.c.h.b16 %v622
      %v628 = vunpack.c.l.b16 %v623
      %v629 = vunpack.c.h.b16 %v623
      %v630 = vpack.c.b16 %v626, %v626
      %v631 = vpack.c.b16 %v627, %v627
      %v632 = vpack.c.b16 %v628, %v628
      %v633 = vpack.c.b16 %v629, %v629
      %638 = vst [vmem:[%s170] sm:$0xf] %v630
      %639 = vst [vmem:[%s170 + $0x4] sm:$0xf] %v631
      %640 = vst [vmem:[%s170 + $0x8] sm:$0xf] %v632
      %vm641 = vcmask 1040384
      %vm642 = vsmask.f32 256
      %vm643 = vmand %vm641, %vm642
      %v644 = vld [vmem:[%s170 + $0xc] sm:$0x1]
      %v645 = vsel %vm643, %v633, %v644
      %646 = vst [vmem:[%s170 + $0xc] sm:$0x1] %v645
      %p647 = scmp.lt.s32.totalorder %s14, 1
      %s648 = scalar_select %p647, %s14, 1
      %s649 = smul.addr %s648, 4
      %s650 = smul.addr %s649, 4
      %s651 = scalar_lea.vmem %s3, %s650
      // Predicated region
      $region33: #{net_forward.4} parent=31 // pred_check
        %p652 = pneg %p100
      $region34: #{net_forward.4} parent=31 // pred_check_branch
        %654 = sbr.rel (%p652) target = $region36
      $region35: #{net_forward.4} parent=31 // pred_region
        _
      $region36: #{net_forward.4} parent=31 // pred_fallthru
        _
    $region32: #{net_forward.4} parent=5 // pred_fallthru
      _
    %p655 = scmp.le.s32.totalorder 2, %s9
    // Predicated region
    $region37: #{net_forward.4} parent=5 // pred_check
      %p656 = pneg %p655
    $region38: #{net_forward.4} parent=5 // pred_check_branch
      %658 = sbr.rel (%p656) target = $region40
    $region39: #{net_forward.4} parent=5 // pred_region
      %s659 = ssub.s32 %s9, 2
      // Predicated region
      $region41: #{net_forward.4} parent=39 // pred_check
        %p660 = pneg %p106
      $region42: #{net_forward.4} parent=39 // pred_check_branch
        %662 = sbr.rel (%p660) target = $region44
      $region43: #{net_forward.4} parent=39 // pred_region
        %p663 = scmp.lt.s32.totalorder %s15, 1
        %s664 = scalar_select %p663, %s15, 1
        %s665 = smul.addr %s664, 4
        %s666 = smul.addr %s665, 4
        %s667 = scalar_lea.vmem %s3, %s666
      $region44: #{net_forward.4} parent=39 // pred_fallthru
        _
    $region40: #{net_forward.4} parent=5 // pred_fallthru
      _
  $region6: #{net_forward.4} parent=0 // loop_footer
    %s13 = sadd.s32 1, %s9
  $region7: #{net_forward.4} parent=0 // loop_footer_branch
    %8 = sbr.rel target = $region3
  $region8: #{net_forward.4} parent=0 // loop_exit
    _

// kernel: net_forward.5
$region0: #{net_forward.5}
  #allocation0 [shape = 'u32[]', space=smem, size = 0x4, offset = 0x4, fixed_abs, tag = 'smem constant byte address 0x4 - core index']
  #allocation1 [shape = 'u32[144,128]{1,0:T(1,128)}', space=vmem, size = 0x12000, scoped, tag = 'internal scratch']
  %s0 = inlined_call_operand.vmem [shape: bf16[8,512], index: 0, kind: input, shape index: {}]
  %s1 = inlined_call_operand.vmem [shape: bf16[512,128], index: 1, kind: input, shape index: {}]
  %s2 = inlined_call_operand.vmem [shape: f32[1,128], index: 2, kind: input, shape index: {}]
  %s3 = inlined_call_operand.vmem [shape: bf16[128,128], index: 3, kind: input, shape index: {}]
  %s4 = inlined_call_operand.vmem [shape: f32[1,128], index: 4, kind: input, shape index: {}]
  %s5 = inlined_call_operand.vmem [shape: f32[8,128], index: 5, kind: output, shape index: {}]
  %s6 = sld [smem:[#allocation0]]
  $region30: #{net_forward.5} parent=0
    _
  %s8 = ssub.s32 1, %s6
  %s9 = scalar_select 0, %s8, %s6
  // Predicated region
  $region2: #{net_forward.5} parent=0 // pred_check
    _
  $region3: #{net_forward.5} parent=0 // pred_check_branch
    %11 = sbr.rel (0) target = $region5
  $region4: #{net_forward.5} parent=0 // pred_region
    _
  $region5: #{net_forward.5} parent=0 // pred_fallthru
    _
  // Predicated region
  $region6: #{net_forward.5} parent=0 // pred_check
    _
  $region7: #{net_forward.5} parent=0 // pred_check_branch
    %13 = sbr.rel (0) target = $region9
  $region8: #{net_forward.5} parent=0 // pred_region
    _
  $region9: #{net_forward.5} parent=0 // pred_fallthru
    _
  // Predicated region
  $region10: #{net_forward.5} parent=0 // pred_check
    _
  $region11: #{net_forward.5} parent=0 // pred_check_branch
    %15 = sbr.rel (0) target = $region13
  $region12: #{net_forward.5} parent=0 // pred_region
    _
  $region13: #{net_forward.5} parent=0 // pred_fallthru
    _
  // Predicated region
  $region14: #{net_forward.5} parent=0 // pred_check
    _
  $region15: #{net_forward.5} parent=0 // pred_check_branch
    %17 = sbr.rel (0) target = $region17
  $region16: #{net_forward.5} parent=0 // pred_region
    _
  $region17: #{net_forward.5} parent=0 // pred_fallthru
    _
  // Predicated region
  $region18: #{net_forward.5} parent=0 // pred_check
    _
  $region19: #{net_forward.5} parent=0 // pred_check_branch
    %19 = sbr.rel (0) target = $region21
  $region20: #{net_forward.5} parent=0 // pred_region
    _
  $region21: #{net_forward.5} parent=0 // pred_fallthru
    _
  %v21 = vld [vmem:[%s0] sm:$0xff]
  %v22 = vld [vmem:[%s0 + $0x8] sm:$0xff]
  %v23 = vld [vmem:[%s1] sm:$0xf]
  %v24 = vld [vmem:[%s1 + $0x4] sm:$0xf]
  %v25 = vld [vmem:[%s1 + $0x8] sm:$0xf]
  %v26 = vld [vmem:[%s1 + $0xc] sm:$0xf]
  %v27 = vld [vmem:[%s1 + $0x10] sm:$0xf]
  %v28 = vld [vmem:[%s1 + $0x14] sm:$0xf]
  %v29 = vld [vmem:[%s1 + $0x18] sm:$0xf]
  %v30 = vld [vmem:[%s1 + $0x1c] sm:$0xf]
  %v31 = vld [vmem:[%s1 + $0x20] sm:$0xf]
  %v32 = vld [vmem:[%s1 + $0x24] sm:$0xf]
  %v33 = vld [vmem:[%s1 + $0x28] sm:$0xf]
  %v34 = vld [vmem:[%s1 + $0x2c] sm:$0xf]
  %v35 = vld [vmem:[%s1 + $0x30] sm:$0xf]
  %v36 = vld [vmem:[%s1 + $0x34] sm:$0xf]
  %v37 = vld [vmem:[%s1 + $0x38] sm:$0xf]
  %v38 = vld [vmem:[%s1 + $0x3c] sm:$0xf]
  %v39 = vld [vmem:[%s1 + $0x40] sm:$0xf]
  %v40 = vld [vmem:[%s1 + $0x44] sm:$0xf]
  %v41 = vld [vmem:[%s1 + $0x48] sm:$0xf]
  %v42 = vld [vmem:[%s1 + $0x4c] sm:$0xf]
  %v43 = vld [vmem:[%s1 + $0x50] sm:$0xf]
  %v44 = vld [vmem:[%s1 + $0x54] sm:$0xf]
  %v45 = vld [vmem:[%s1 + $0x58] sm:$0xf]
  %v46 = vld [vmem:[%s1 + $0x5c] sm:$0xf]
  %v47 = vld [vmem:[%s1 + $0x60] sm:$0xf]
  %v48 = vld [vmem:[%s1 + $0x64] sm:$0xf]
  %v49 = vld [vmem:[%s1 + $0x68] sm:$0xf]
  %v50 = vld [vmem:[%s1 + $0x6c] sm:$0xf]
  %v51 = vld [vmem:[%s1 + $0x70] sm:$0xf]
  %v52 = vld [vmem:[%s1 + $0x74] sm:$0xf]
  %v53 = vld [vmem:[%s1 + $0x78] sm:$0xf]
  %v54 = vld [vmem:[%s1 + $0x7c] sm:$0xf]
  %v55 = vld [vmem:[%s1 + $0x80] sm:$0xf]
  %v56 = vld [vmem:[%s1 + $0x84] sm:$0xf]
  %v57 = vld [vmem:[%s1 + $0x88] sm:$0xf]
  %v58 = vld [vmem:[%s1 + $0x8c] sm:$0xf]
  %v59 = vld [vmem:[%s1 + $0x90] sm:$0xf]
  %v60 = vld [vmem:[%s1 + $0x94] sm:$0xf]
  %v61 = vld [vmem:[%s1 + $0x98] sm:$0xf]
  %v62 = vld [vmem:[%s1 + $0x9c] sm:$0xf]
  %v63 = vld [vmem:[%s1 + $0xa0] sm:$0xf]
  %v64 = vld [vmem:[%s1 + $0xa4] sm:$0xf]
  %v65 = vld [vmem:[%s1 + $0xa8] sm:$0xf]
  %v66 = vld [vmem:[%s1 + $0xac] sm:$0xf]
  %v67 = vld [vmem:[%s1 + $0xb0] sm:$0xf]
  %v68 = vld [vmem:[%s1 + $0xb4] sm:$0xf]
  %v69 = vld [vmem:[%s1 + $0xb8] sm:$0xf]
  %v70 = vld [vmem:[%s1 + $0xbc] sm:$0xf]
  %v71 = vld [vmem:[%s1 + $0xc0] sm:$0xf]
  %v72 = vld [vmem:[%s1 + $0xc4] sm:$0xf]
  %v73 = vld [vmem:[%s1 + $0xc8] sm:$0xf]
  %v74 = vld [vmem:[%s1 + $0xcc] sm:$0xf]
  %v75 = vld [vmem:[%s1 + $0xd0] sm:$0xf]
  %v76 = vld [vmem:[%s1 + $0xd4] sm:$0xf]
  %v77 = vld [vmem:[%s1 + $0xd8] sm:$0xf]
  %v78 = vld [vmem:[%s1 + $0xdc] sm:$0xf]
  %v79 = vld [vmem:[%s1 + $0xe0] sm:$0xf]
  %v80 = vld [vmem:[%s1 + $0xe4] sm:$0xf]
  %v81 = vld [vmem:[%s1 + $0xe8] sm:$0xf]
  %v82 = vld [vmem:[%s1 + $0xec] sm:$0xf]
  %v83 = vld [vmem:[%s1 + $0xf0] sm:$0xf]
  %v84 = vld [vmem:[%s1 + $0xf4] sm:$0xf]
  %v85 = vld [vmem:[%s1 + $0xf8] sm:$0xf]
  %v86 = vld [vmem:[%s1 + $0xfc] sm:$0xf]
  %v87 = vld [vmem:[%s2] sm:$0x1]
  %v89 = vlaneseq
  %v90 = vshrl.u32 %v89, 7
  %v91 = vsub.s32 0, %v90
  %v92 = vrot.slane %v87, %v91
  %v96 = vunpack.c.l.b16 %v21
  %v97 = vunpack.c.h.b16 %v21
  %v98 = vunpack.c.l.b16 %v22
  %v99 = vunpack.c.h.b16 %v22
  %v100 = vpack.c.b16 %v96, %v96
  %v101 = vpack.c.b16 %v97, %v97
  %v102 = vpack.c.b16 %v98, %v98
  %v103 = vpack.c.b16 %v99, %v99
  %v172 = vunpack.c.l.b16 %v23
  %v173 = vunpack.c.l.b16 %v24
  %v174 = vunpack.c.l.b16 %v25
  %v175 = vunpack.c.l.b16 %v26
  %v176 = vunpack.c.l.b16 %v27
  %v177 = vunpack.c.l.b16 %v28
  %v178 = vunpack.c.l.b16 %v29
  %v179 = vunpack.c.l.b16 %v30
  %v180 = vunpack.c.l.b16 %v31
  %v181 = vunpack.c.l.b16 %v32
  %v182 = vunpack.c.l.b16 %v33
  %v183 = vunpack.c.l.b16 %v34
  %v184 = vunpack.c.l.b16 %v35
  %v185 = vunpack.c.l.b16 %v36
  %v186 = vunpack.c.l.b16 %v37
  %v187 = vunpack.c.l.b16 %v38
  %v188 = vunpack.c.l.b16 %v39
  %v189 = vunpack.c.l.b16 %v40
  %v190 = vunpack.c.l.b16 %v41
  %v191 = vunpack.c.l.b16 %v42
  %v192 = vunpack.c.l.b16 %v43
  %v193 = vunpack.c.l.b16 %v44
  %v194 = vunpack.c.l.b16 %v45
  %v195 = vunpack.c.l.b16 %v46
  %v196 = vunpack.c.l.b16 %v47
  %v197 = vunpack.c.l.b16 %v48
  %v198 = vunpack.c.l.b16 %v49
  %v199 = vunpack.c.l.b16 %v50
  %v200 = vunpack.c.l.b16 %v51
  %v201 = vunpack.c.l.b16 %v52
  %v202 = vunpack.c.l.b16 %v53
  %v203 = vunpack.c.l.b16 %v54
  %v204 = vunpack.c.l.b16 %v55
  %v205 = vunpack.c.l.b16 %v56
  %v206 = vunpack.c.l.b16 %v57
  %v207 = vunpack.c.l.b16 %v58
  %v208 = vunpack.c.l.b16 %v59
  %v209 = vunpack.c.l.b16 %v60
  %v210 = vunpack.c.l.b16 %v61
  %v211 = vunpack.c.l.b16 %v62
  %v212 = vunpack.c.l.b16 %v63
  %v213 = vunpack.c.l.b16 %v64
  %v214 = vunpack.c.l.b16 %v65
  %v215 = vunpack.c.l.b16 %v66
  %v216 = vunpack.c.l.b16 %v67
  %v217 = vunpack.c.l.b16 %v68
  %v218 = vunpack.c.l.b16 %v69
  %v219 = vunpack.c.l.b16 %v70
  %v220 = vunpack.c.l.b16 %v71
  %v221 = vunpack.c.l.b16 %v72
  %v222 = vunpack.c.l.b16 %v73
  %v223 = vunpack.c.l.b16 %v74
  %v224 = vunpack.c.l.b16 %v75
  %v225 = vunpack.c.l.b16 %v76
  %v226 = vunpack.c.l.b16 %v77
  %v227 = vunpack.c.l.b16 %v78
  %v228 = vunpack.c.l.b16 %v79
  %v229 = vunpack.c.l.b16 %v80
  %v230 = vunpack.c.l.b16 %v81
  %v231 = vunpack.c.l.b16 %v82
  %v232 = vunpack.c.l.b16 %v83
  %v233 = vunpack.c.l.b16 %v84
  %v234 = vunpack.c.l.b16 %v85
  %v235 = vunpack.c.l.b16 %v86
  %v236 = vpack.c.b16 %v173, %v172
  %v237 = vpack.c.b16 %v175, %v174
  %v238 = vpack.c.b16 %v177, %v176
  %v239 = vpack.c.b16 %v179, %v178
  %v240 = vpack.c.b16 %v181, %v180
  %v241 = vpack.c.b16 %v183, %v182
  %v242 = vpack.c.b16 %v185, %v184
  %v243 = vpack.c.b16 %v187, %v186
  %v244 = vpack.c.b16 %v189, %v188
  %v245 = vpack.c.b16 %v191, %v190
  %v246 = vpack.c.b16 %v193, %v192
  %v247 = vpack.c.b16 %v195, %v194
  %v248 = vpack.c.b16 %v197, %v196
  %v249 = vpack.c.b16 %v199, %v198
  %v250 = vpack.c.b16 %v201, %v200
  %v251 = vpack.c.b16 %v203, %v202
  %v252 = vpack.c.b16 %v205, %v204
  %v253 = vpack.c.b16 %v207, %v206
  %v254 = vpack.c.b16 %v209, %v208
  %v255 = vpack.c.b16 %v211, %v210
  %v256 = vpack.c.b16 %v213, %v212
  %v257 = vpack.c.b16 %v215, %v214
  %v258 = vpack.c.b16 %v217, %v216
  %v259 = vpack.c.b16 %v219, %v218
  %v260 = vpack.c.b16 %v221, %v220
  %v261 = vpack.c.b16 %v223, %v222
  %v262 = vpack.c.b16 %v225, %v224
  %v263 = vpack.c.b16 %v227, %v226
  %v264 = vpack.c.b16 %v229, %v228
  %v265 = vpack.c.b16 %v231, %v230
  %v266 = vpack.c.b16 %v233, %v232
  %v267 = vpack.c.b16 %v235, %v234
  %300 = vmatprep.subr.bf16.mxu0 0
  %301 = vmatpush1.bf16.msra.mxu0 %v236
  %302 = vmatprep.subr.bf16.mxu0 0
  %303 = vmatpush1.bf16.msra.mxu0 %v237
  %304 = vmatprep.subr.bf16.mxu0 0
  %305 = vmatpush1.bf16.msra.mxu0 %v238
  %306 = vmatprep.subr.bf16.mxu0 0
  %307 = vmatpush1.bf16.msra.mxu0 %v239
  %308 = vmatprep.subr.bf16.mxu0 0
  %309 = vmatpush1.bf16.msra.mxu0 %v240
  %310 = vmatprep.subr.bf16.mxu0 0
  %311 = vmatpush1.bf16.msra.mxu0 %v241
  %312 = vmatprep.subr.bf16.mxu0 0
  %313 = vmatpush1.bf16.msra.mxu0 %v242
  %314 = vmatprep.subr.bf16.mxu0 0
  %315 = vmatpush1.bf16.msra.mxu0 %v243
  %316 = vmatprep.subr.bf16.mxu0 0
  %317 = vmatpush1.bf16.msra.mxu0 %v244
  %318 = vmatprep.subr.bf16.mxu0 0
  %319 = vmatpush1.bf16.msra.mxu0 %v245
  %320 = vmatprep.subr.bf16.mxu0 0
  %321 = vmatpush1.bf16.msra.mxu0 %v246
  %322 = vmatprep.subr.bf16.mxu0 0
  %323 = vmatpush1.bf16.msra.mxu0 %v247
  %324 = vmatprep.subr.bf16.mxu0 0
  %325 = vmatpush1.bf16.msra.mxu0 %v248
  %326 = vmatprep.subr.bf16.mxu0 0
  %327 = vmatpush1.bf16.msra.mxu0 %v249
  %328 = vmatprep.subr.bf16.mxu0 0
  %329 = vmatpush1.bf16.msra.mxu0 %v250
  %330 = vmatprep.subr.bf16.mxu0 0
  %331 = vmatpush1.bf16.msra.mxu0 %v251
  %332 = vmatprep.mubr.bf16.mxu0 %v101
  %333 = vmatmul.mubr.bf16.gmra.mrb[0].mxu0 %v100
  %v334 = vpop.f32.mrb[0].mxu0
  %v335 = vadd.f32 %v92, %v334
  %v336 = vpop.f32.mrb[0].mxu0
  %v337 = vpop.f32.mrb[0].mxu0
  %v338 = vpop.f32.mrb[0].mxu0
  %339 = vdwg.mxu0
  %340 = vmatprep.subr.bf16.mxu0 0
  %341 = vmatpush1.bf16.msra.mxu0 %v252
  %342 = vmatprep.subr.bf16.mxu0 0
  %343 = vmatpush1.bf16.msra.mxu0 %v253
  %344 = vmatprep.subr.bf16.mxu0 0
  %345 = vmatpush1.bf16.msra.mxu0 %v254
  %346 = vmatprep.subr.bf16.mxu0 0
  %347 = vmatpush1.bf16.msra.mxu0 %v255
  %348 = vmatprep.subr.bf16.mxu0 0
  %349 = vmatpush1.bf16.msra.mxu0 %v256
  %350 = vmatprep.subr.bf16.mxu0 0
  %351 = vmatpush1.bf16.msra.mxu0 %v257
  %352 = vmatprep.subr.bf16.mxu0 0
  %353 = vmatpush1.bf16.msra.mxu0 %v258
  %354 = vmatprep.subr.bf16.mxu0 0
  %355 = vmatpush1.bf16.msra.mxu0 %v259
  %356 = vmatprep.subr.bf16.mxu0 0
  %357 = vmatpush1.bf16.msra.mxu0 %v260
  %358 = vmatprep.subr.bf16.mxu0 0
  %359 = vmatpush1.bf16.msra.mxu0 %v261
  %360 = vmatprep.subr.bf16.mxu0 0
  %361 = vmatpush1.bf16.msra.mxu0 %v262
  %362 = vmatprep.subr.bf16.mxu0 0
  %363 = vmatpush1.bf16.msra.mxu0 %v263
  %364 = vmatprep.subr.bf16.mxu0 0
  %365 = vmatpush1.bf16.msra.mxu0 %v264
  %366 = vmatprep.subr.bf16.mxu0 0
  %367 = vmatpush1.bf16.msra.mxu0 %v265
  %368 = vmatprep.subr.bf16.mxu0 0
  %369 = vmatpush1.bf16.msra.mxu0 %v266
  %370 = vmatprep.subr.bf16.mxu0 0
  %371 = vmatpush1.bf16.msra.mxu0 %v267
  %372 = vmatprep.mubr.bf16.mxu0 %v103
  %373 = vmatmul.mubr.bf16.gmra.mrb[0].mxu0 %v102
  %v374 = vpop.f32.mrb[0].mxu0
  %v375 = vadd.f32 %v335, %v374
  %v376 = vpop.f32.mrb[0].mxu0
  %v377 = vpop.f32.mrb[0].mxu0
  %v378 = vpop.f32.mrb[0].mxu0
  %379 = vdwg.mxu0
  %v380 = vmax.f32 %v375, 0.0
  %v381 = vpack.c.bf16 %v380, %v380
  %v382 = vld [vmem:[%s3] sm:$0xf]
  %v383 = vld [vmem:[%s3 + $0x4] sm:$0xf]
  %v384 = vld [vmem:[%s3 + $0x8] sm:$0xf]
  %v385 = vld [vmem:[%s3 + $0xc] sm:$0xf]
  %v386 = vld [vmem:[%s3 + $0x10] sm:$0xf]
  %v387 = vld [vmem:[%s3 + $0x14] sm:$0xf]
  %v388 = vld [vmem:[%s3 + $0x18] sm:$0xf]
  %v389 = vld [vmem:[%s3 + $0x1c] sm:$0xf]
  %v390 = vld [vmem:[%s3 + $0x20] sm:$0xf]
  %v391 = vld [vmem:[%s3 + $0x24] sm:$0xf]
  %v392 = vld [vmem:[%s3 + $0x28] sm:$0xf]
  %v393 = vld [vmem:[%s3 + $0x2c] sm:$0xf]
  %v394 = vld [vmem:[%s3 + $0x30] sm:$0xf]
  %v395 = vld [vmem:[%s3 + $0x34] sm:$0xf]
  %v396 = vld [vmem:[%s3 + $0x38] sm:$0xf]
  %v397 = vld [vmem:[%s3 + $0x3c] sm:$0xf]
  %v398 = vld [vmem:[%s4] sm:$0x1]
  %v400 = vlaneseq
  %v401 = vshrl.u32 %v400, 7
  %v402 = vsub.s32 0, %v401
  %v403 = vrot.slane %v398, %v402
  %v421 = vunpack.c.l.b16 %v382
  %v422 = vunpack.c.l.b16 %v383
  %v423 = vunpack.c.l.b16 %v384
  %v424 = vunpack.c.l.b16 %v385
  %v425 = vunpack.c.l.b16 %v386
  %v426 = vunpack.c.l.b16 %v387
  %v427 = vunpack.c.l.b16 %v388
  %v428 = vunpack.c.l.b16 %v389
  %v429 = vunpack.c.l.b16 %v390
  %v430 = vunpack.c.l.b16 %v391
  %v431 = vunpack.c.l.b16 %v392
  %v432 = vunpack.c.l.b16 %v393
  %v433 = vunpack.c.l.b16 %v394
  %v434 = vunpack.c.l.b16 %v395
  %v435 = vunpack.c.l.b16 %v396
  %v436 = vunpack.c.l.b16 %v397
  %v437 = vpack.c.b16 %v422, %v421
  %v438 = vpack.c.b16 %v424, %v423
  %v439 = vpack.c.b16 %v426, %v425
  %v440 = vpack.c.b16 %v428, %v427
  %v441 = vpack.c.b16 %v430, %v429
  %v442 = vpack.c.b16 %v432, %v431
  %v443 = vpack.c.b16 %v434, %v433
  %v444 = vpack.c.b16 %v436, %v435
  %453 = vmatprep.subr.bf16.mxu0 0
  %454 = vmatpush1.bf16.msra.mxu0 %v437
  %455 = vmatprep.subr.bf16.mxu0 0
  %456 = vmatpush1.bf16.msra.mxu0 %v438
  %457 = vmatprep.subr.bf16.mxu0 0
  %458 = vmatpush1.bf16.msra.mxu0 %v439
  %459 = vmatprep.subr.bf16.mxu0 0
  %460 = vmatpush1.bf16.msra.mxu0 %v440
  %461 = vmatprep.subr.bf16.mxu0 0
  %462 = vmatpush1.bf16.msra.mxu0 %v441
  %463 = vmatprep.subr.bf16.mxu0 0
  %464 = vmatpush1.bf16.msra.mxu0 %v442
  %465 = vmatprep.subr.bf16.mxu0 0
  %466 = vmatpush1.bf16.msra.mxu0 %v443
  %467 = vmatprep.subr.bf16.mxu0 0
  %468 = vmatpush1.bf16.msra.mxu0 %v444
  %469 = vmatprep.subr.bf16.mxu0 0
  %470 = vmatpush1.bf16.msra.mxu0 0
  %471 = vmatprep.subr.bf16.mxu0 0
  %472 = vmatpush1.bf16.msra.mxu0 0
  %473 = vmatprep.subr.bf16.mxu0 0
  %474 = vmatpush1.bf16.msra.mxu0 0
  %475 = vmatprep.subr.bf16.mxu0 0
  %476 = vmatpush1.bf16.msra.mxu0 0
  %477 = vmatprep.subr.bf16.mxu0 0
  %478 = vmatpush1.bf16.msra.mxu0 0
  %479 = vmatprep.subr.bf16.mxu0 0
  %480 = vmatpush1.bf16.msra.mxu0 0
  %481 = vmatprep.subr.bf16.mxu0 0
  %482 = vmatpush1.bf16.msra.mxu0 0
  %483 = vmatprep.subr.bf16.mxu0 0
  %484 = vmatpush1.bf16.msra.mxu0 0
  %485 = vmatprep.mubr.bf16.mxu0 0
  %486 = vmatmul.mubr.bf16.gmra.mrb[0].mxu0 %v381
  %v487 = vpop.f32.mrb[0].mxu0
  %v488 = vadd.f32 %v403, %v487
  %v489 = vpop.f32.mrb[0].mxu0
  %v490 = vpop.f32.mrb[0].mxu0
  %v491 = vpop.f32.mrb[0].mxu0
  %492 = vdwg.mxu0
  %493 = vst [vmem:[%s5] sm:$0xff] %v488
  // Predicated region
  $region22: #{net_forward.5} parent=0 // pred_check
    _
  $region23: #{net_forward.5} parent=0 // pred_check_branch
    %495 = sbr.rel (0) target = $region25
  $region24: #{net_forward.5} parent=0 // pred_region
    _
  $region25: #{net_forward.5} parent=0 // pred_fallthru
    _
  // Predicated region
  $region26: #{net_forward.5} parent=0 // pred_check
    _
  $region27: #{net_forward.5} parent=0 // pred_check_branch
    %497 = sbr.rel (0) target = $region29
  $region28: #{net_forward.5} parent=0 // pred_region
    _
  $region29: #{net_forward.5} parent=0 // pred_fallthru
    _

</llo_original>
